<compile_context>
chip_gen: v7x
topology: tpu7x:2x2x1
jax: 0.10.0
libtpu: 0.0.40
codegen_flags: <defaults>
</compile_context>

<pallas_src>
import functools

import jax
import jax.numpy as jnp
from jax.experimental import pallas as pl
from jax.experimental.pallas import tpu as pltpu

NEG_INF = -1e9


def _elu(x):
    return jnp.where(x > 0, x, jnp.exp(jnp.minimum(x, 0.0)) - 1.0)


def _leaky_relu(x, slope=0.2):
    return jnp.where(x > 0, x, slope * x)


# ---------------------------------------------------------------------------
# Kernel 1: dense GATConv (all heads) + SemanticAttention per-node score.
#           grid = (metapath, dst-row tile)
# ---------------------------------------------------------------------------
def gat_semantic_kernel(adj_ref, h_ref, w_ref, atta_ref, b_ref, w1_ref, b1_ref,
                        w2_ref, out_ref, score_ref, z_sc, elT_sc, er_sc, *, H, D):
    q = pl.program_id(1)
    TQ = out_ref.shape[1]

    # --- once per metapath: fused projection + attention terms for all heads ---
    @pl.when(q == 0)
    def _():
        z = jnp.dot(h_ref[...], w_ref[0], preferred_element_type=jnp.float32)  # [N, HD]
        z_sc[...] = z
        # el/er for ALL heads from one small matmul against the packed
        # block-diagonal [HD, 2H] matrix built from attn_l | attn_r.
        att = jnp.dot(z, atta_ref[0], preferred_element_type=jnp.float32)      # [N, 2H]
        er_sc[...] = att[:, H:]          # dst term per node        [N, H]
        elT_sc[...] = att[:, :H].T       # src term, lane-major     [H, N] (one transpose / metapath)

    z = z_sc[...]                                       # [N, HD]  (all source nodes)
    elT = elT_sc[...]                                   # [H, N]
    row0 = pl.multiple_of(q * TQ, TQ)
    er_t = er_sc[pl.ds(row0, TQ), :]                    # [TQ, H]  (this dst tile)

    # {0,1} int8 adjacency tile -> additive mask, shared across all heads.
    adjf = adj_ref[0].astype(jnp.float32)               # [TQ, N]
    mask_bias = jnp.where(adjf > 0.5, 0.0, NEG_INF)     # [TQ, N]
    bias = b_ref[0]                                     # [1, HD]

    for hh in range(H):                                 # heads: static unroll
        zh = z[:, hh * D:(hh + 1) * D]                  # [N, D]
        # e[dst, src] = leaky_relu(er[dst] + el[src]), masked on the logits.
        e = _leaky_relu(er_t[:, hh:hh + 1] + elT[hh:hh + 1, :]) + mask_bias
        e = e - jnp.max(e, axis=1, keepdims=True)
        p = jnp.exp(e)                                  # masked entries underflow to exactly 0
        denom = jnp.maximum(jnp.sum(p, axis=1, keepdims=True), 1e-30)  # guard 0-in-degree rows
        alpha = p * pl.reciprocal(denom, approx=True)   # EUP reciprocal instead of VPU divide
        outh = jnp.dot(alpha, zh, preferred_element_type=jnp.float32)  # [TQ, D]
        outh = _elu(outh + bias[:, hh * D:(hh + 1) * D])
        out_ref[0, :, hh * D:(hh + 1) * D] = outh.astype(out_ref.dtype)

    # Fused SemanticAttention per-node score: tanh(emb @ W1 + b1) @ w2
    emb = out_ref[0]                                    # [TQ, HD]
    proj = jnp.tanh(jnp.dot(emb, w1_ref[...], preferred_element_type=jnp.float32)
                    + b1_ref[...])                      # [TQ, Hid]
    score_ref[0] = jnp.dot(proj, w2_ref[...], preferred_element_type=jnp.float32)  # [TQ, 1]


# ---------------------------------------------------------------------------
# Kernel 2: beta-weighted sum over metapaths, tiled over node rows.
# ---------------------------------------------------------------------------
def weighted_sum_kernel(z_ref, beta_ref, out_ref, *, M):
    acc = beta_ref[0] * z_ref[0]                        # scalar (SMEM) * [TQ, HD]
    for m in range(1, M):
        acc = acc + beta_ref[m] * z_ref[m]
    out_ref[...] = acc.astype(out_ref.dtype)


# ---------------------------------------------------------------------------
# Wrapper
# ---------------------------------------------------------------------------
def han_layer_forward(adj, h, gat_W, gat_al, gat_ar, gat_b, sem_W1, sem_b1, sem_w2,
                      *, tile_q=None):
    M, N, _ = adj.shape
    Fin = h.shape[1]
    H, D = gat_al.shape[1], gat_al.shape[2]
    HD = H * D
    Hid = sem_W1.shape[1]

    if tile_q is None:
        tile_q = N
        for cand in (512, 256, 128, 64, 32, 16, 8):
            if N % cand == 0:
                tile_q = cand
                break
    TQ = tile_q
    assert N % TQ == 0, "number of nodes must be divisible by the dst tile size"
    NQ = N // TQ

    # Adjacency only acts as a {0,1} connectivity mask: carry it as int8.
    if adj.dtype != jnp.int8:
        adj = (adj != 0).astype(jnp.int8)

    # Block-diagonal [HD, 2H] matrix packing attn_l / attn_r for all heads.
    eye_h = jnp.eye(H, dtype=jnp.float32)
    a_l = (gat_al[:, :, :, None] * eye_h[None, :, None, :]).reshape(M, HD, H)
    a_r = (gat_ar[:, :, :, None] * eye_h[None, :, None, :]).reshape(M, HD, H)
    att_a = jnp.concatenate([a_l, a_r], axis=-1)        # [M, HD, 2H]

    structural, node_scores = pl.pallas_call(
        functools.partial(gat_semantic_kernel, H=H, D=D),
        out_shape=(
            jax.ShapeDtypeStruct((M, N, HD), jnp.float32),
            jax.ShapeDtypeStruct((M, N, 1), jnp.float32),
        ),
        grid=(M, NQ),
        in_specs=[
            pl.BlockSpec((1, TQ, N), lambda m, q: (m, q, 0)),       # adjacency tile (int8)
            pl.BlockSpec((N, Fin), lambda m, q: (0, 0)),            # shared node features
            pl.BlockSpec((1, Fin, HD), lambda m, q: (m, 0, 0)),     # GAT fc weight
            pl.BlockSpec((1, HD, 2 * H), lambda m, q: (m, 0, 0)),   # packed attn_l|attn_r
            pl.BlockSpec((1, 1, HD), lambda m, q: (m, 0, 0)),       # GAT bias
            pl.BlockSpec((HD, Hid), lambda m, q: (0, 0)),           # semantic W1
            pl.BlockSpec((1, Hid), lambda m, q: (0, 0)),            # semantic b1
            pl.BlockSpec((Hid, 1), lambda m, q: (0, 0)),            # semantic w2
        ],
        out_specs=(
            pl.BlockSpec((1, TQ, HD), lambda m, q: (m, q, 0)),      # structural embeddings
            pl.BlockSpec((1, TQ, 1), lambda m, q: (m, q, 0)),       # per-node semantic scores
        ),
        scratch_shapes=[
            pltpu.VMEM((N, HD), jnp.float32),   # projected features z (cached per metapath)
            pltpu.VMEM((H, N), jnp.float32),    # el (src attention term), lane-major
            pltpu.VMEM((N, H), jnp.float32),    # er (dst attention term)
        ],
        compiler_params=pltpu.CompilerParams(
            # metapaths across cores; dst-tile axis is 'arbitrary' because the
            # projection scratch is reused across tiles of the same metapath.
            dimension_semantics=("parallel", "arbitrary"),
            vmem_limit_bytes=32 * 1024 * 1024,
        ),
    )(adj, h, gat_W, att_a, gat_b.reshape(M, 1, HD),
      sem_W1, sem_b1.reshape(1, Hid), sem_w2.reshape(Hid, 1))

    # Tiny glue (O(M*N)): mean score per metapath + softmax over M metapaths.
    w = jnp.mean(node_scores, axis=1)                   # [M, 1]
    beta = jax.nn.softmax(w, axis=0)[:, 0]              # [M]

    out = pl.pallas_call(
        functools.partial(weighted_sum_kernel, M=M),
        out_shape=jax.ShapeDtypeStruct((N, HD), jnp.float32),
        grid=(NQ,),
        in_specs=[
            pl.BlockSpec((M, TQ, HD), lambda q: (0, q, 0)),
            pl.BlockSpec(memory_space=pltpu.MemorySpace.SMEM),      # beta: M scalars
        ],
        out_specs=pl.BlockSpec((TQ, HD), lambda q: (q, 0)),
        compiler_params=pltpu.CompilerParams(
            dimension_semantics=("parallel",),
            vmem_limit_bytes=32 * 1024 * 1024,
        ),
    )(structural, beta)
    return out


# ---------------------------------------------------------------------------
# Pure-JAX reference (mirrors the PyTorch module semantics)
# ---------------------------------------------------------------------------
def han_layer_reference(adj, h, gat_W, gat_al, gat_ar, gat_b, sem_W1, sem_b1, sem_w2):
    M, N, _ = adj.shape
    H, D = gat_al.shape[1], gat_al.shape[2]
    HD = H * D
    embs = []
    for m in range(M):
        z = h @ gat_W[m]                              # [N, HD]
        zh = z.reshape(N, H, D)
        el = jnp.sum(zh * gat_al[m][None], axis=-1)   # [N, H]
        er = jnp.sum(zh * gat_ar[m][None], axis=-1)   # [N, H]
        e = er[:, None, :] + el[None, :, :]           # [dst, src, H]
        e = jnp.where(e > 0, e, 0.2 * e)
        mask = (adj[m] > 0)[:, :, None]
        e = jnp.where(mask, e, NEG_INF)
        e = e - jnp.max(e, axis=1, keepdims=True)
        p = jnp.where(mask, jnp.exp(e), 0.0)
        alpha = p / jnp.sum(p, axis=1, keepdims=True)
        out = jnp.einsum("dsh,shk->dhk", alpha, zh).reshape(N, HD) + gat_b[m]
        out = jnp.where(out > 0, out, jnp.exp(jnp.minimum(out, 0.0)) - 1.0)
        embs.append(out)
    zstack = jnp.stack(embs, axis=1)                                  # [N, M, HD]
    proj = jnp.tanh(zstack @ sem_W1 + sem_b1) @ sem_w2[:, None]       # [N, M, 1]
    w = proj.mean(0)                                                  # [M, 1]
    beta = jax.nn.softmax(w, axis=0)                                  # [M, 1]
    return (beta[None] * zstack).sum(1)                               # [N, HD]


if __name__ == "__main__":
    # small shapes: num_meta_paths=3, nodes=64, in_size=16, out_size=16, heads=4
    M, N, Fin, D, H, Hid = 3, 64, 16, 16, 4, 128
    HD = H * D

    key = jax.random.PRNGKey(0)
    keys = jax.random.split(key, 9)

    edges = jax.random.uniform(keys[0], (M, N, N)) < 0.2
    adj = (edges | jnp.eye(N, dtype=bool)[None]).astype(jnp.int8)     # add self-loops

    h = jax.random.normal(keys[1], (N, Fin), jnp.float32)
    gat_W = 0.3 * jax.random.normal(keys[2], (M, Fin, HD), jnp.float32)
    gat_al = 0.3 * jax.random.normal(keys[3], (M, H, D), jnp.float32)
    gat_ar = 0.3 * jax.random.normal(keys[4], (M, H, D), jnp.float32)
    gat_b = 0.1 * jax.random.normal(keys[5], (M, HD), jnp.float32)
    sem_W1 = 0.2 * jax.random.normal(keys[6], (HD, Hid), jnp.float32)
    sem_b1 = 0.1 * jax.random.normal(keys[7], (Hid,), jnp.float32)
    sem_w2 = 0.2 * jax.random.normal(keys[8], (Hid,), jnp.float32)

    out = han_layer_forward(adj, h, gat_W, gat_al, gat_ar, gat_b,
                            sem_W1, sem_b1, sem_w2, tile_q=32)
    out = jax.block_until_ready(out)

    ref = han_layer_reference(adj, h, gat_W, gat_al, gat_ar, gat_b,
                              sem_W1, sem_b1, sem_w2)
    assert out.shape == (N, HD)
    assert jnp.allclose(out, ref, atol=2e-3, rtol=2e-3), "kernel output mismatch vs reference"

    print("KERNEL_OK")
</pallas_src>

<mosaic_0001>
module attributes {stable_mosaic.version = 11 : i64} {
  func.func @gat_semantic_kernel(%arg0: i32, %arg1: i32, %arg2: memref<1x32x64xi8, #tpu.memory_space<vmem>>, %arg3: memref<64x16xf32, #tpu.memory_space<vmem>>, %arg4: memref<1x16x64xf32, #tpu.memory_space<vmem>>, %arg5: memref<1x64x8xf32, #tpu.memory_space<vmem>>, %arg6: memref<1x1x64xf32, #tpu.memory_space<vmem>>, %arg7: memref<64x128xf32, #tpu.memory_space<vmem>>, %arg8: memref<1x128xf32, #tpu.memory_space<vmem>>, %arg9: memref<128x1xf32, #tpu.memory_space<vmem>>, %arg10: memref<1x32x64xf32, #tpu.memory_space<vmem>>, %arg11: memref<1x32x1xf32, #tpu.memory_space<vmem>>, %arg12: memref<64x64xf32, #tpu.memory_space<vmem>>, %arg13: memref<4x64xf32, #tpu.memory_space<vmem>>, %arg14: memref<64x4xf32, #tpu.memory_space<vmem>>) attributes {dimension_semantics = [#tpu.dimension_semantics<parallel>, #tpu.dimension_semantics<arbitrary>], iteration_bounds = array<i64: 3, 2>, scalar_prefetch = 0 : i64, scratch_operands = 3 : i64, tpu.core_type = #tpu.core_type<tc>, window_params = [{transform_indices = @transform_0, window_bounds = array<i64: 1, 32, 64>}, {pipeline_mode = #tpu.pipeline_mode<synchronous>, transform_indices = @transform_1, window_bounds = array<i64: 64, 16>}, {transform_indices = @transform_2, window_bounds = array<i64: 1, 16, 64>}, {transform_indices = @transform_3, window_bounds = array<i64: 1, 64, 8>}, {transform_indices = @transform_4, window_bounds = array<i64: 1, 1, 64>}, {pipeline_mode = #tpu.pipeline_mode<synchronous>, transform_indices = @transform_5, window_bounds = array<i64: 64, 128>}, {pipeline_mode = #tpu.pipeline_mode<synchronous>, transform_indices = @transform_6, window_bounds = array<i64: 1, 128>}, {pipeline_mode = #tpu.pipeline_mode<synchronous>, transform_indices = @transform_7, window_bounds = array<i64: 128, 1>}, {transform_indices = @transform_8, window_bounds = array<i64: 1, 32, 64>}, {transform_indices = @transform_9, window_bounds = array<i64: 1, 32, 1>}]} {
    %c0_i32 = arith.constant 0 : i32
    %0 = arith.cmpi eq, %arg1, %c0_i32 : i32
    %1 = arith.extui %0 : i1 to i32
    %c0_i32_0 = arith.constant 0 : i32
    %2 = arith.cmpi ne, %1, %c0_i32_0 : i32
    scf.if %2 {
      %c0_72 = arith.constant 0 : index
      %c0_73 = arith.constant 0 : index
      %188 = vector.load %arg3[%c0_72, %c0_73] : memref<64x16xf32, #tpu.memory_space<vmem>>, vector<64x16xf32>
      %c0_74 = arith.constant 0 : index
      %c0_75 = arith.constant 0 : index
      %c0_76 = arith.constant 0 : index
      %189 = vector.load %arg4[%c0_74, %c0_75, %c0_76] : memref<1x16x64xf32, #tpu.memory_space<vmem>>, vector<1x16x64xf32>
      %190 = vector.shape_cast %189 : vector<1x16x64xf32> to vector<16x64xf32>
      %cst_77 = arith.constant dense<0.000000e+00> : vector<64x64xf32>
      %191 = tpu.matmul %188, %190, %cst_77 {dimension_numbers = #tpu.dot_dimension_numbers<[1], [0], [0], [1], [0, 0, 1, 1], [], []>} : vector<64x16xf32>, vector<16x64xf32>, vector<64x64xf32> -> vector<64x64xf32>
      %c0_78 = arith.constant 0 : index
      %c0_79 = arith.constant 0 : index
      %192 = vector.load %arg12[%c0_78, %c0_79] : memref<64x64xf32, #tpu.memory_space<vmem>>, vector<64x64xf32>
      tpu.vector_store %arg12[%c0_78, %c0_79], %191 {strides = array<i32>} : memref<64x64xf32, #tpu.memory_space<vmem>>, vector<64x64xf32>,
      %c0_80 = arith.constant 0 : index
      %c0_81 = arith.constant 0 : index
      %c0_82 = arith.constant 0 : index
      %193 = vector.load %arg5[%c0_80, %c0_81, %c0_82] : memref<1x64x8xf32, #tpu.memory_space<vmem>>, vector<1x64x8xf32>
      %194 = vector.shape_cast %193 : vector<1x64x8xf32> to vector<64x8xf32>
      %cst_83 = arith.constant dense<0.000000e+00> : vector<64x8xf32>
      %195 = tpu.matmul %191, %194, %cst_83 {dimension_numbers = #tpu.dot_dimension_numbers<[1], [0], [0], [1], [0, 0, 1, 1], [], []>} : vector<64x64xf32>, vector<64x8xf32>, vector<64x8xf32> -> vector<64x8xf32>
      %196 = vector.extract_strided_slice %195 {offsets = [0, 4], sizes = [64, 4], strides = [1, 1]} : vector<64x8xf32> to vector<64x4xf32>
      %c0_84 = arith.constant 0 : index
      %c0_85 = arith.constant 0 : index
      %197 = vector.load %arg14[%c0_84, %c0_85] : memref<64x4xf32, #tpu.memory_space<vmem>>, vector<64x4xf32>
      tpu.vector_store %arg14[%c0_84, %c0_85], %196 {strides = array<i32>} : memref<64x4xf32, #tpu.memory_space<vmem>>, vector<64x4xf32>,
      %198 = vector.extract_strided_slice %195 {offsets = [0, 0], sizes = [64, 4], strides = [1, 1]} : vector<64x8xf32> to vector<64x4xf32>
      %199 = tpu.transpose %198, [1, 0] : vector<64x4xf32> -> vector<4x64xf32>
      %c0_86 = arith.constant 0 : index
      %c0_87 = arith.constant 0 : index
      %200 = vector.load %arg13[%c0_86, %c0_87] : memref<4x64xf32, #tpu.memory_space<vmem>>, vector<4x64xf32>
      tpu.vector_store %arg13[%c0_86, %c0_87], %199 {strides = array<i32>} : memref<4x64xf32, #tpu.memory_space<vmem>>, vector<4x64xf32>,
    } else {
    }
    %c0 = arith.constant 0 : index
    %c0_1 = arith.constant 0 : index
    %3 = vector.load %arg12[%c0, %c0_1] : memref<64x64xf32, #tpu.memory_space<vmem>>, vector<64x64xf32>
    %c0_2 = arith.constant 0 : index
    %c0_3 = arith.constant 0 : index
    %4 = vector.load %arg13[%c0_2, %c0_3] : memref<4x64xf32, #tpu.memory_space<vmem>>, vector<4x64xf32>
    %c32_i32 = arith.constant 32 : i32
    %5 = arith.muli %arg1, %c32_i32 : i32
    %6 = tpu.assume_multiple %5, 32 : i32
    %7 = arith.index_cast %6 : i32 to index
    %c0_4 = arith.constant 0 : index
    %8 = vector.load %arg14[%7, %c0_4] : memref<64x4xf32, #tpu.memory_space<vmem>>, vector<32x4xf32>
    %c0_5 = arith.constant 0 : index
    %c0_6 = arith.constant 0 : index
    %c0_7 = arith.constant 0 : index
    %9 = vector.load %arg2[%c0_5, %c0_6, %c0_7] : memref<1x32x64xi8, #tpu.memory_space<vmem>>, vector<1x32x64xi8>
    %10 = vector.shape_cast %9 : vector<1x32x64xi8> to vector<32x64xi8>
    %11 = arith.sitofp %10 : vector<32x64xi8> to vector<32x64xf32>
    %cst = arith.constant 5.000000e-01 : f32
    %12 = vector.broadcast %cst : f32 to vector<32x64xf32>
    %13 = arith.cmpf ogt, %11, %12 : vector<32x64xf32>
    %cst_8 = arith.constant 0.000000e+00 : f32
    %cst_9 = arith.constant -1.000000e+09 : f32
    %14 = vector.broadcast %cst_8 : f32 to vector<32x64xf32>
    %15 = vector.broadcast %cst_9 : f32 to vector<32x64xf32>
    %16 = arith.select %13, %14, %15 : vector<32x64xi1>, vector<32x64xf32>
    %c0_10 = arith.constant 0 : index
    %c0_11 = arith.constant 0 : index
    %c0_12 = arith.constant 0 : index
    %17 = vector.load %arg6[%c0_10, %c0_11, %c0_12] : memref<1x1x64xf32, #tpu.memory_space<vmem>>, vector<1x1x64xf32>
    %18 = vector.shape_cast %17 : vector<1x1x64xf32> to vector<1x64xf32>
    %19 = vector.extract_strided_slice %3 {offsets = [0, 0], sizes = [64, 16], strides = [1, 1]} : vector<64x64xf32> to vector<64x16xf32>
    %20 = vector.extract_strided_slice %8 {offsets = [0, 0], sizes = [32, 1], strides = [1, 1]} : vector<32x4xf32> to vector<32x1xf32>
    %21 = vector.extract_strided_slice %4 {offsets = [0, 0], sizes = [1, 64], strides = [1, 1]} : vector<4x64xf32> to vector<1x64xf32>
    %22 = vector.broadcast %20 : vector<32x1xf32> to vector<32x64xf32>
    %23 = vector.broadcast %21 : vector<1x64xf32> to vector<32x64xf32>
    %24 = arith.addf %22, %23 : vector<32x64xf32>
    %cst_13 = arith.constant 0.000000e+00 : f32
    %25 = vector.broadcast %cst_13 : f32 to vector<32x64xf32>
    %26 = arith.cmpf ogt, %24, %25 : vector<32x64xf32>
    %cst_14 = arith.constant 2.000000e-01 : f32
    %27 = vector.broadcast %cst_14 : f32 to vector<32x64xf32>
    %28 = arith.mulf %27, %24 : vector<32x64xf32>
    %29 = arith.select %26, %24, %28 : vector<32x64xi1>, vector<32x64xf32>
    %30 = arith.addf %29, %16 : vector<32x64xf32>
    %cst_15 = arith.constant dense<0xFF800000> : vector<32xf32>
    %31 = vector.multi_reduction <maximumf>, %30, %cst_15 [1] : vector<32x64xf32> to vector<32xf32>
    %32 = vector.shape_cast %31 : vector<32xf32> to vector<32x1xf32>
    %33 = vector.broadcast %32 : vector<32x1xf32> to vector<32x64xf32>
    %34 = arith.subf %30, %33 : vector<32x64xf32>
    %35 = math.exp %34 : vector<32x64xf32>
    %cst_16 = arith.constant dense<0.000000e+00> : vector<32xf32>
    %36 = vector.multi_reduction <add>, %35, %cst_16 [1] : vector<32x64xf32> to vector<32xf32>
    %37 = vector.shape_cast %36 : vector<32xf32> to vector<32x1xf32>
    %cst_17 = arith.constant 1.000000e-30 : f32
    %38 = vector.broadcast %cst_17 : f32 to vector<32x1xf32>
    %39 = arith.maximumf %37, %38 : vector<32x1xf32>
    %40 = tpu.reciprocal %39 {approx = true} : vector<32x1xf32> -> vector<32x1xf32>
    %41 = vector.broadcast %40 : vector<32x1xf32> to vector<32x64xf32>
    %42 = arith.mulf %35, %41 : vector<32x64xf32>
    %cst_18 = arith.constant dense<0.000000e+00> : vector<32x16xf32>
    %43 = tpu.matmul %42, %19, %cst_18 {dimension_numbers = #tpu.dot_dimension_numbers<[1], [0], [0], [1], [0, 0, 1, 1], [], []>} : vector<32x64xf32>, vector<64x16xf32>, vector<32x16xf32> -> vector<32x16xf32>
    %44 = vector.extract_strided_slice %18 {offsets = [0, 0], sizes = [1, 16], strides = [1, 1]} : vector<1x64xf32> to vector<1x16xf32>
    %45 = vector.broadcast %44 : vector<1x16xf32> to vector<32x16xf32>
    %46 = arith.addf %43, %45 : vector<32x16xf32>
    %cst_19 = arith.constant 0.000000e+00 : f32
    %47 = vector.broadcast %cst_19 : f32 to vector<32x16xf32>
    %48 = arith.cmpf ogt, %46, %47 : vector<32x16xf32>
    %cst_20 = arith.constant 0.000000e+00 : f32
    %49 = vector.broadcast %cst_20 : f32 to vector<32x16xf32>
    %50 = arith.minimumf %46, %49 : vector<32x16xf32>
    %51 = math.exp %50 : vector<32x16xf32>
    %cst_21 = arith.constant 1.000000e+00 : f32
    %52 = vector.broadcast %cst_21 : f32 to vector<32x16xf32>
    %53 = arith.subf %51, %52 : vector<32x16xf32>
    %54 = arith.select %48, %46, %53 : vector<32x16xi1>, vector<32x16xf32>
    %c0_22 = arith.constant 0 : index
    %c0_23 = arith.constant 0 : index
    %c0_24 = arith.constant 0 : index
    %55 = vector.load %arg10[%c0_22, %c0_23, %c0_24] : memref<1x32x64xf32, #tpu.memory_space<vmem>>, vector<1x32x16xf32>
    %56 = vector.shape_cast %55 : vector<1x32x16xf32> to vector<32x16xf32>
    %57 = vector.shape_cast %54 : vector<32x16xf32> to vector<1x32x16xf32>
    tpu.vector_store %arg10[%c0_22, %c0_23, %c0_24], %57 {strides = array<i32>} : memref<1x32x64xf32, #tpu.memory_space<vmem>>, vector<1x32x16xf32>,
    %58 = vector.extract_strided_slice %3 {offsets = [0, 16], sizes = [64, 16], strides = [1, 1]} : vector<64x64xf32> to vector<64x16xf32>
    %59 = vector.extract_strided_slice %8 {offsets = [0, 1], sizes = [32, 1], strides = [1, 1]} : vector<32x4xf32> to vector<32x1xf32>
    %60 = vector.extract_strided_slice %4 {offsets = [1, 0], sizes = [1, 64], strides = [1, 1]} : vector<4x64xf32> to vector<1x64xf32>
    %61 = vector.broadcast %59 : vector<32x1xf32> to vector<32x64xf32>
    %62 = vector.broadcast %60 : vector<1x64xf32> to vector<32x64xf32>
    %63 = arith.addf %61, %62 : vector<32x64xf32>
    %cst_25 = arith.constant 0.000000e+00 : f32
    %64 = vector.broadcast %cst_25 : f32 to vector<32x64xf32>
    %65 = arith.cmpf ogt, %63, %64 : vector<32x64xf32>
    %cst_26 = arith.constant 2.000000e-01 : f32
    %66 = vector.broadcast %cst_26 : f32 to vector<32x64xf32>
    %67 = arith.mulf %66, %63 : vector<32x64xf32>
    %68 = arith.select %65, %63, %67 : vector<32x64xi1>, vector<32x64xf32>
    %69 = arith.addf %68, %16 : vector<32x64xf32>
    %cst_27 = arith.constant dense<0xFF800000> : vector<32xf32>
    %70 = vector.multi_reduction <maximumf>, %69, %cst_27 [1] : vector<32x64xf32> to vector<32xf32>
    %71 = vector.shape_cast %70 : vector<32xf32> to vector<32x1xf32>
    %72 = vector.broadcast %71 : vector<32x1xf32> to vector<32x64xf32>
    %73 = arith.subf %69, %72 : vector<32x64xf32>
    %74 = math.exp %73 : vector<32x64xf32>
    %cst_28 = arith.constant dense<0.000000e+00> : vector<32xf32>
    %75 = vector.multi_reduction <add>, %74, %cst_28 [1] : vector<32x64xf32> to vector<32xf32>
    %76 = vector.shape_cast %75 : vector<32xf32> to vector<32x1xf32>
    %cst_29 = arith.constant 1.000000e-30 : f32
    %77 = vector.broadcast %cst_29 : f32 to vector<32x1xf32>
    %78 = arith.maximumf %76, %77 : vector<32x1xf32>
    %79 = tpu.reciprocal %78 {approx = true} : vector<32x1xf32> -> vector<32x1xf32>
    %80 = vector.broadcast %79 : vector<32x1xf32> to vector<32x64xf32>
    %81 = arith.mulf %74, %80 : vector<32x64xf32>
    %cst_30 = arith.constant dense<0.000000e+00> : vector<32x16xf32>
    %82 = tpu.matmul %81, %58, %cst_30 {dimension_numbers = #tpu.dot_dimension_numbers<[1], [0], [0], [1], [0, 0, 1, 1], [], []>} : vector<32x64xf32>, vector<64x16xf32>, vector<32x16xf32> -> vector<32x16xf32>
    %83 = vector.extract_strided_slice %18 {offsets = [0, 16], sizes = [1, 16], strides = [1, 1]} : vector<1x64xf32> to vector<1x16xf32>
    %84 = vector.broadcast %83 : vector<1x16xf32> to vector<32x16xf32>
    %85 = arith.addf %82, %84 : vector<32x16xf32>
    %cst_31 = arith.constant 0.000000e+00 : f32
    %86 = vector.broadcast %cst_31 : f32 to vector<32x16xf32>
    %87 = arith.cmpf ogt, %85, %86 : vector<32x16xf32>
    %cst_32 = arith.constant 0.000000e+00 : f32
    %88 = vector.broadcast %cst_32 : f32 to vector<32x16xf32>
    %89 = arith.minimumf %85, %88 : vector<32x16xf32>
    %90 = math.exp %89 : vector<32x16xf32>
    %cst_33 = arith.constant 1.000000e+00 : f32
    %91 = vector.broadcast %cst_33 : f32 to vector<32x16xf32>
    %92 = arith.subf %90, %91 : vector<32x16xf32>
    %93 = arith.select %87, %85, %92 : vector<32x16xi1>, vector<32x16xf32>
    %c0_34 = arith.constant 0 : index
    %c0_35 = arith.constant 0 : index
    %c16 = arith.constant 16 : index
    %94 = vector.load %arg10[%c0_34, %c0_35, %c16] : memref<1x32x64xf32, #tpu.memory_space<vmem>>, vector<1x32x16xf32>
    %95 = vector.shape_cast %94 : vector<1x32x16xf32> to vector<32x16xf32>
    %96 = vector.shape_cast %93 : vector<32x16xf32> to vector<1x32x16xf32>
    tpu.vector_store %arg10[%c0_34, %c0_35, %c16], %96 {strides = array<i32>} : memref<1x32x64xf32, #tpu.memory_space<vmem>>, vector<1x32x16xf32>,
    %97 = vector.extract_strided_slice %3 {offsets = [0, 32], sizes = [64, 16], strides = [1, 1]} : vector<64x64xf32> to vector<64x16xf32>
    %98 = vector.extract_strided_slice %8 {offsets = [0, 2], sizes = [32, 1], strides = [1, 1]} : vector<32x4xf32> to vector<32x1xf32>
    %99 = vector.extract_strided_slice %4 {offsets = [2, 0], sizes = [1, 64], strides = [1, 1]} : vector<4x64xf32> to vector<1x64xf32>
    %100 = vector.broadcast %98 : vector<32x1xf32> to vector<32x64xf32>
    %101 = vector.broadcast %99 : vector<1x64xf32> to vector<32x64xf32>
    %102 = arith.addf %100, %101 : vector<32x64xf32>
    %cst_36 = arith.constant 0.000000e+00 : f32
    %103 = vector.broadcast %cst_36 : f32 to vector<32x64xf32>
    %104 = arith.cmpf ogt, %102, %103 : vector<32x64xf32>
    %cst_37 = arith.constant 2.000000e-01 : f32
    %105 = vector.broadcast %cst_37 : f32 to vector<32x64xf32>
    %106 = arith.mulf %105, %102 : vector<32x64xf32>
    %107 = arith.select %104, %102, %106 : vector<32x64xi1>, vector<32x64xf32>
    %108 = arith.addf %107, %16 : vector<32x64xf32>
    %cst_38 = arith.constant dense<0xFF800000> : vector<32xf32>
    %109 = vector.multi_reduction <maximumf>, %108, %cst_38 [1] : vector<32x64xf32> to vector<32xf32>
    %110 = vector.shape_cast %109 : vector<32xf32> to vector<32x1xf32>
    %111 = vector.broadcast %110 : vector<32x1xf32> to vector<32x64xf32>
    %112 = arith.subf %108, %111 : vector<32x64xf32>
    %113 = math.exp %112 : vector<32x64xf32>
    %cst_39 = arith.constant dense<0.000000e+00> : vector<32xf32>
    %114 = vector.multi_reduction <add>, %113, %cst_39 [1] : vector<32x64xf32> to vector<32xf32>
    %115 = vector.shape_cast %114 : vector<32xf32> to vector<32x1xf32>
    %cst_40 = arith.constant 1.000000e-30 : f32
    %116 = vector.broadcast %cst_40 : f32 to vector<32x1xf32>
    %117 = arith.maximumf %115, %116 : vector<32x1xf32>
    %118 = tpu.reciprocal %117 {approx = true} : vector<32x1xf32> -> vector<32x1xf32>
    %119 = vector.broadcast %118 : vector<32x1xf32> to vector<32x64xf32>
    %120 = arith.mulf %113, %119 : vector<32x64xf32>
    %cst_41 = arith.constant dense<0.000000e+00> : vector<32x16xf32>
    %121 = tpu.matmul %120, %97, %cst_41 {dimension_numbers = #tpu.dot_dimension_numbers<[1], [0], [0], [1], [0, 0, 1, 1], [], []>} : vector<32x64xf32>, vector<64x16xf32>, vector<32x16xf32> -> vector<32x16xf32>
    %122 = vector.extract_strided_slice %18 {offsets = [0, 32], sizes = [1, 16], strides = [1, 1]} : vector<1x64xf32> to vector<1x16xf32>
    %123 = vector.broadcast %122 : vector<1x16xf32> to vector<32x16xf32>
    %124 = arith.addf %121, %123 : vector<32x16xf32>
    %cst_42 = arith.constant 0.000000e+00 : f32
    %125 = vector.broadcast %cst_42 : f32 to vector<32x16xf32>
    %126 = arith.cmpf ogt, %124, %125 : vector<32x16xf32>
    %cst_43 = arith.constant 0.000000e+00 : f32
    %127 = vector.broadcast %cst_43 : f32 to vector<32x16xf32>
    %128 = arith.minimumf %124, %127 : vector<32x16xf32>
    %129 = math.exp %128 : vector<32x16xf32>
    %cst_44 = arith.constant 1.000000e+00 : f32
    %130 = vector.broadcast %cst_44 : f32 to vector<32x16xf32>
    %131 = arith.subf %129, %130 : vector<32x16xf32>
    %132 = arith.select %126, %124, %131 : vector<32x16xi1>, vector<32x16xf32>
    %c0_45 = arith.constant 0 : index
    %c0_46 = arith.constant 0 : index
    %c32 = arith.constant 32 : index
    %133 = vector.load %arg10[%c0_45, %c0_46, %c32] : memref<1x32x64xf32, #tpu.memory_space<vmem>>, vector<1x32x16xf32>
    %134 = vector.shape_cast %133 : vector<1x32x16xf32> to vector<32x16xf32>
    %135 = vector.shape_cast %132 : vector<32x16xf32> to vector<1x32x16xf32>
    tpu.vector_store %arg10[%c0_45, %c0_46, %c32], %135 {strides = array<i32>} : memref<1x32x64xf32, #tpu.memory_space<vmem>>, vector<1x32x16xf32>,
    %136 = vector.extract_strided_slice %3 {offsets = [0, 48], sizes = [64, 16], strides = [1, 1]} : vector<64x64xf32> to vector<64x16xf32>
    %137 = vector.extract_strided_slice %8 {offsets = [0, 3], sizes = [32, 1], strides = [1, 1]} : vector<32x4xf32> to vector<32x1xf32>
    %138 = vector.extract_strided_slice %4 {offsets = [3, 0], sizes = [1, 64], strides = [1, 1]} : vector<4x64xf32> to vector<1x64xf32>
    %139 = vector.broadcast %137 : vector<32x1xf32> to vector<32x64xf32>
    %140 = vector.broadcast %138 : vector<1x64xf32> to vector<32x64xf32>
    %141 = arith.addf %139, %140 : vector<32x64xf32>
    %cst_47 = arith.constant 0.000000e+00 : f32
    %142 = vector.broadcast %cst_47 : f32 to vector<32x64xf32>
    %143 = arith.cmpf ogt, %141, %142 : vector<32x64xf32>
    %cst_48 = arith.constant 2.000000e-01 : f32
    %144 = vector.broadcast %cst_48 : f32 to vector<32x64xf32>
    %145 = arith.mulf %144, %141 : vector<32x64xf32>
    %146 = arith.select %143, %141, %145 : vector<32x64xi1>, vector<32x64xf32>
    %147 = arith.addf %146, %16 : vector<32x64xf32>
    %cst_49 = arith.constant dense<0xFF800000> : vector<32xf32>
    %148 = vector.multi_reduction <maximumf>, %147, %cst_49 [1] : vector<32x64xf32> to vector<32xf32>
    %149 = vector.shape_cast %148 : vector<32xf32> to vector<32x1xf32>
    %150 = vector.broadcast %149 : vector<32x1xf32> to vector<32x64xf32>
    %151 = arith.subf %147, %150 : vector<32x64xf32>
    %152 = math.exp %151 : vector<32x64xf32>
    %cst_50 = arith.constant dense<0.000000e+00> : vector<32xf32>
    %153 = vector.multi_reduction <add>, %152, %cst_50 [1] : vector<32x64xf32> to vector<32xf32>
    %154 = vector.shape_cast %153 : vector<32xf32> to vector<32x1xf32>
    %cst_51 = arith.constant 1.000000e-30 : f32
    %155 = vector.broadcast %cst_51 : f32 to vector<32x1xf32>
    %156 = arith.maximumf %154, %155 : vector<32x1xf32>
    %157 = tpu.reciprocal %156 {approx = true} : vector<32x1xf32> -> vector<32x1xf32>
    %158 = vector.broadcast %157 : vector<32x1xf32> to vector<32x64xf32>
    %159 = arith.mulf %152, %158 : vector<32x64xf32>
    %cst_52 = arith.constant dense<0.000000e+00> : vector<32x16xf32>
    %160 = tpu.matmul %159, %136, %cst_52 {dimension_numbers = #tpu.dot_dimension_numbers<[1], [0], [0], [1], [0, 0, 1, 1], [], []>} : vector<32x64xf32>, vector<64x16xf32>, vector<32x16xf32> -> vector<32x16xf32>
    %161 = vector.extract_strided_slice %18 {offsets = [0, 48], sizes = [1, 16], strides = [1, 1]} : vector<1x64xf32> to vector<1x16xf32>
    %162 = vector.broadcast %161 : vector<1x16xf32> to vector<32x16xf32>
    %163 = arith.addf %160, %162 : vector<32x16xf32>
    %cst_53 = arith.constant 0.000000e+00 : f32
    %164 = vector.broadcast %cst_53 : f32 to vector<32x16xf32>
    %165 = arith.cmpf ogt, %163, %164 : vector<32x16xf32>
    %cst_54 = arith.constant 0.000000e+00 : f32
    %166 = vector.broadcast %cst_54 : f32 to vector<32x16xf32>
    %167 = arith.minimumf %163, %166 : vector<32x16xf32>
    %168 = math.exp %167 : vector<32x16xf32>
    %cst_55 = arith.constant 1.000000e+00 : f32
    %169 = vector.broadcast %cst_55 : f32 to vector<32x16xf32>
    %170 = arith.subf %168, %169 : vector<32x16xf32>
    %171 = arith.select %165, %163, %170 : vector<32x16xi1>, vector<32x16xf32>
    %c0_56 = arith.constant 0 : index
    %c0_57 = arith.constant 0 : index
    %c48 = arith.constant 48 : index
    %172 = vector.load %arg10[%c0_56, %c0_57, %c48] : memref<1x32x64xf32, #tpu.memory_space<vmem>>, vector<1x32x16xf32>
    %173 = vector.shape_cast %172 : vector<1x32x16xf32> to vector<32x16xf32>
    %174 = vector.shape_cast %171 : vector<32x16xf32> to vector<1x32x16xf32>
    tpu.vector_store %arg10[%c0_56, %c0_57, %c48], %174 {strides = array<i32>} : memref<1x32x64xf32, #tpu.memory_space<vmem>>, vector<1x32x16xf32>,
    %c0_58 = arith.constant 0 : index
    %c0_59 = arith.constant 0 : index
    %c0_60 = arith.constant 0 : index
    %175 = vector.load %arg10[%c0_58, %c0_59, %c0_60] : memref<1x32x64xf32, #tpu.memory_space<vmem>>, vector<1x32x64xf32>
    %176 = vector.shape_cast %175 : vector<1x32x64xf32> to vector<32x64xf32>
    %c0_61 = arith.constant 0 : index
    %c0_62 = arith.constant 0 : index
    %177 = vector.load %arg7[%c0_61, %c0_62] : memref<64x128xf32, #tpu.memory_space<vmem>>, vector<64x128xf32>
    %cst_63 = arith.constant dense<0.000000e+00> : vector<32x128xf32>
    %178 = tpu.matmul %176, %177, %cst_63 {dimension_numbers = #tpu.dot_dimension_numbers<[1], [0], [0], [1], [0, 0, 1, 1], [], []>} : vector<32x64xf32>, vector<64x128xf32>, vector<32x128xf32> -> vector<32x128xf32>
    %c0_64 = arith.constant 0 : index
    %c0_65 = arith.constant 0 : index
    %179 = vector.load %arg8[%c0_64, %c0_65] : memref<1x128xf32, #tpu.memory_space<vmem>>, vector<1x128xf32>
    %180 = vector.broadcast %179 : vector<1x128xf32> to vector<32x128xf32>
    %181 = arith.addf %178, %180 : vector<32x128xf32>
    %182 = math.tanh %181 : vector<32x128xf32>
    %c0_66 = arith.constant 0 : index
    %c0_67 = arith.constant 0 : index
    %183 = vector.load %arg9[%c0_66, %c0_67] : memref<128x1xf32, #tpu.memory_space<vmem>>, vector<128x1xf32>
    %cst_68 = arith.constant dense<0.000000e+00> : vector<32x1xf32>
    %184 = tpu.matmul %182, %183, %cst_68 {dimension_numbers = #tpu.dot_dimension_numbers<[1], [0], [0], [1], [0, 0, 1, 1], [], []>} : vector<32x128xf32>, vector<128x1xf32>, vector<32x1xf32> -> vector<32x1xf32>
    %c0_69 = arith.constant 0 : index
    %c0_70 = arith.constant 0 : index
    %c0_71 = arith.constant 0 : index
    %185 = vector.load %arg11[%c0_69, %c0_70, %c0_71] : memref<1x32x1xf32, #tpu.memory_space<vmem>>, vector<1x32x1xf32>
    %186 = vector.shape_cast %185 : vector<1x32x1xf32> to vector<32x1xf32>
    %187 = vector.shape_cast %184 : vector<32x1xf32> to vector<1x32x1xf32>
    tpu.vector_store %arg11[%c0_69, %c0_70, %c0_71], %187 {strides = array<i32>} : memref<1x32x1xf32, #tpu.memory_space<vmem>>, vector<1x32x1xf32>,
    return
  }
  func.func @transform_0(%arg0: i32, %arg1: i32) -> (i32, i32, i32) {
    %c0_i32 = arith.constant 0 : i32
    %c0_i32_0 = arith.constant 0 : i32
    return %arg0, %arg1, %c0_i32 : i32, i32, i32
  }
  func.func @transform_1(%arg0: i32, %arg1: i32) -> (i32, i32) {
    %c0_i32 = arith.constant 0 : i32
    %c0_i32_0 = arith.constant 0 : i32
    %c0_i32_1 = arith.constant 0 : i32
    return %c0_i32, %c0_i32_0 : i32, i32
  }
  func.func @transform_2(%arg0: i32, %arg1: i32) -> (i32, i32, i32) {
    %c0_i32 = arith.constant 0 : i32
    %c0_i32_0 = arith.constant 0 : i32
    %c0_i32_1 = arith.constant 0 : i32
    return %arg0, %c0_i32, %c0_i32_0 : i32, i32, i32
  }
  func.func @transform_3(%arg0: i32, %arg1: i32) -> (i32, i32, i32) {
    %c0_i32 = arith.constant 0 : i32
    %c0_i32_0 = arith.constant 0 : i32
    %c0_i32_1 = arith.constant 0 : i32
    return %arg0, %c0_i32, %c0_i32_0 : i32, i32, i32
  }
  func.func @transform_4(%arg0: i32, %arg1: i32) -> (i32, i32, i32) {
    %c0_i32 = arith.constant 0 : i32
    %c0_i32_0 = arith.constant 0 : i32
    %c0_i32_1 = arith.constant 0 : i32
    return %arg0, %c0_i32, %c0_i32_0 : i32, i32, i32
  }
  func.func @transform_5(%arg0: i32, %arg1: i32) -> (i32, i32) {
    %c0_i32 = arith.constant 0 : i32
    %c0_i32_0 = arith.constant 0 : i32
    %c0_i32_1 = arith.constant 0 : i32
    return %c0_i32, %c0_i32_0 : i32, i32
  }
  func.func @transform_6(%arg0: i32, %arg1: i32) -> (i32, i32) {
    %c0_i32 = arith.constant 0 : i32
    %c0_i32_0 = arith.constant 0 : i32
    %c0_i32_1 = arith.constant 0 : i32
    return %c0_i32, %c0_i32_0 : i32, i32
  }
  func.func @transform_7(%arg0: i32, %arg1: i32) -> (i32, i32) {
    %c0_i32 = arith.constant 0 : i32
    %c0_i32_0 = arith.constant 0 : i32
    %c0_i32_1 = arith.constant 0 : i32
    return %c0_i32, %c0_i32_0 : i32, i32
  }
  func.func @transform_8(%arg0: i32, %arg1: i32) -> (i32, i32, i32) {
    %c0_i32 = arith.constant 0 : i32
    %c0_i32_0 = arith.constant 0 : i32
    return %arg0, %arg1, %c0_i32 : i32, i32, i32
  }
  func.func @transform_9(%arg0: i32, %arg1: i32) -> (i32, i32, i32) {
    %c0_i32 = arith.constant 0 : i32
    %c0_i32_0 = arith.constant 0 : i32
    return %arg0, %arg1, %c0_i32 : i32, i32, i32
  }
}

</mosaic_0001>

<llo_original>
// kernel: tpu_custom_call.1
$region0: #{tpu_custom_call.1}
  #allocation0 [shape = 'u32[]', space=smem, size = 0x4, offset = 0x4, fixed_abs, tag = 'smem constant byte address 0x4 - core index']
  #allocation1 [shape = 'u32[144,128]{1,0:T(1,128)}', space=vmem, size = 0x12000, scoped, tag = 'internal scratch']
  #allocation2 [shape = 'f32[64,64]{1,0:T(8,128)}', space=vmem, size = 0x8000, scoped, tag = 'scratch operand']
  #allocation3 [shape = 'f32[4,64]{1,0:T(4,128)}', space=vmem, size = 0x800, scoped, tag = 'scratch operand']
  #allocation4 [shape = 'f32[64,4]{1,0:T(8,128)}', space=vmem, size = 0x8000, scoped, tag = 'scratch operand']
  %s0 = inlined_call_operand.vmem [shape: s8[3,64,64], index: 0, kind: input, shape index: {}]
  %s1 = inlined_call_operand.vmem [shape: f32[64,16], index: 1, kind: input, shape index: {}]
  %s2 = inlined_call_operand.vmem [shape: f32[3,16,64], index: 2, kind: input, shape index: {}]
  %s3 = inlined_call_operand.vmem [shape: f32[3,64,8], index: 3, kind: input, shape index: {}]
  %s4 = inlined_call_operand.vmem [shape: f32[3,1,64], index: 4, kind: input, shape index: {}]
  %s5 = inlined_call_operand.vmem [shape: f32[64,128], index: 5, kind: input, shape index: {}]
  %s6 = inlined_call_operand.vmem [shape: f32[1,128], index: 6, kind: input, shape index: {}]
  %s7 = inlined_call_operand.vmem [shape: f32[128,1], index: 7, kind: input, shape index: {}]
  %s8 = inlined_call_operand.hbm [shape: f32[3,64,64], index: 8, kind: output, shape index: {0}]
  %s9 = inlined_call_operand.vmem [shape: f32[3,64,1], index: 9, kind: output, shape index: {1}]
  %10 = xla_tuple %s8, %s9
  %s11 = sld [smem:[#allocation0]]
  $region77: #{tpu_custom_call.1} parent=0
    _
  %s13 = ssub.s32 1, %s11
  %s14 = scalar_select 0, %s13, %s11
  $region1: #{tpu_custom_call.1} parent=0
    #allocation5 [shape = 'u8[32768]{0}', space=vmem, size = 0x8000, scoped, tag = 'output window, operand 0']
    #allocation6 [shape = 's32[2]{0}', space=sflag, size = 0x8, scoped, tag = 'scoped memory for tpu_custom_call.1']
    %15 = vsyncpa [#allocation6], 0
    %s16 = scalar_lea.sflag [#allocation6], 1
    %17 = vsyncpa %s16, 0
    loop: start=0, step=1, limit=8
    $region2: #{tpu_custom_call.1} parent=1 // loop_pre_header
      _
    $region3: #{tpu_custom_call.1} parent=1 // loop_header
      %s19 = sphi 0, %s23
      %p20 = scmp.ge.s32.totalorder %s19, 8
      %s26 = sphi 0, %s38
      %s27 = sphi 0, %s34
      %s28 = sphi 0, %s26
      %s29 = sphi 0, %s27
      %s30 = sphi 0, %s28
      %s31 = sphi 0, %s29
      %s43 = sphi 0, %s45
      %s46 = sphi 0, %s43
      %s47 = sphi 0, %s46
      %s63 = sphi 0, %s47
      %s67 = sphi 0, %s67
      %s69 = sphi 0, %s67
      %s70 = sphi 0, %s69
      %s84 = sphi 0, %s70
      %s90 = sphi 0, %s92
      %s93 = sphi 0, %s90
      %s94 = sphi 0, %s93
      %s110 = sphi 0, %s94
      %s116 = sphi 0, %s118
      %s119 = sphi 0, %s116
      %s120 = sphi 0, %s119
      %s136 = sphi 0, %s120
      %s142 = sphi 0, %s144
      %s145 = sphi 0, %s142
      %s146 = sphi 0, %s145
      %s162 = sphi 0, %s146
      %s166 = sphi 0, %s166
      %s168 = sphi 0, %s166
      %s169 = sphi 0, %s168
      %s183 = sphi 0, %s169
      %s187 = sphi 0, %s187
      %s189 = sphi 0, %s187
      %s190 = sphi 0, %s189
      %s204 = sphi 0, %s190
      %s208 = sphi 0, %s208
      %s210 = sphi 0, %s208
      %s211 = sphi 0, %s210
      %s225 = sphi 0, %s211
      %s233 = sphi 0, %s235
      %s236 = sphi 0, %s233
      %s237 = sphi 0, %s236
      %s253 = sphi 0, %s237
      %s261 = sphi 0, %s263
      %s264 = sphi 0, %s261
      %s265 = sphi 0, %s264
      %s281 = sphi 0, %s265
    $region4: #{tpu_custom_call.1} parent=1 // loop_header_branch
      %22 = sbr.rel (%p20) target = $region8
    $region5: #{tpu_custom_call.1} parent=1 // loop_body
      %s24 = ssub.s32 %s19, 1
      %s25 = ssub.s32 %s19, 2
      %s32 = sadd.s32 1, %s27
      %p33 = scmp.ge.s32.totalorder %s32, 2
      %s34 = scalar_select %p33, 0, %s32
      %s35 = sadd.s32 1, %s26
      %s36 = scalar_select %p33, %s35, %s26
      %p37 = scmp.ge.s32.totalorder %s36, 3
      %s38 = scalar_select %p37, 0, %s36
      %s39 = ssub.s32 %s26, %s38
      %s40 = ssub.s32 %s27, %s34
      %s41 = sor.u32 %s39, %s40
      %p42 = scmp.eq.s32.totalorder %s41, 0
      %s44 = sadd.s32 %s43, 1
      %s45 = scalar_select %p42, %s43, %s44
      %p48 = pneg %p42
      %p49 = scmp.eq.s32.totalorder %s19, 5
      %p50 = por %p48, %p49
      %p51 = scmp.ne.s32.totalorder %s43, %s46
      %p52 = scmp.eq.s32.totalorder %s19, 0
      %p53 = por %p51, %p52
      %p54 = scmp.ne.s32.totalorder %s43, %s46
      %p55 = scmp.eq.s32.totalorder %s24, 5
      %p56 = por %p54, %p55
      %p57 = scmp.ne.s32.totalorder %s46, %s47
      %p58 = scmp.eq.s32.totalorder %s24, 0
      %p59 = por %p57, %p58
      %p60 = scmp.ne.s32.totalorder %s46, %s47
      %p61 = scmp.eq.s32.totalorder %s25, 5
      %p62 = por %p60, %p61
      %p64 = scmp.ne.s32.totalorder %s47, %s63
      %p65 = scmp.eq.s32.totalorder %s25, 0
      %p66 = por %p64, %p65
      %s68 = sadd.s32 %s67, 1
      %p71 = scmp.eq.s32.totalorder %s19, 5
      %p72 = scmp.ne.s32.totalorder %s67, %s69
      %p73 = scmp.eq.s32.totalorder %s19, 0
      %p74 = por %p72, %p73
      %p75 = scmp.ne.s32.totalorder %s67, %s69
      %p76 = scmp.eq.s32.totalorder %s24, 5
      %p77 = por %p75, %p76
      %p78 = scmp.ne.s32.totalorder %s69, %s70
      %p79 = scmp.eq.s32.totalorder %s24, 0
      %p80 = por %p78, %p79
      %p81 = scmp.ne.s32.totalorder %s69, %s70
      %p82 = scmp.eq.s32.totalorder %s25, 5
      %p83 = por %p81, %p82
      %p85 = scmp.ne.s32.totalorder %s70, %s84
      %p86 = scmp.eq.s32.totalorder %s25, 0
      %p87 = por %p85, %p86
      %s88 = ssub.s32 %s26, %s38
      %p89 = scmp.eq.s32.totalorder %s88, 0
      %s91 = sadd.s32 %s90, 1
      %s92 = scalar_select %p89, %s90, %s91
      %p95 = pneg %p89
      %p96 = scmp.eq.s32.totalorder %s19, 5
      %p97 = por %p95, %p96
      %p98 = scmp.ne.s32.totalorder %s90, %s93
      %p99 = scmp.eq.s32.totalorder %s19, 0
      %p100 = por %p98, %p99
      %p101 = scmp.ne.s32.totalorder %s90, %s93
      %p102 = scmp.eq.s32.totalorder %s24, 5
      %p103 = por %p101, %p102
      %p104 = scmp.ne.s32.totalorder %s93, %s94
      %p105 = scmp.eq.s32.totalorder %s24, 0
      %p106 = por %p104, %p105
      %p107 = scmp.ne.s32.totalorder %s93, %s94
      %p108 = scmp.eq.s32.totalorder %s25, 5
      %p109 = por %p107, %p108
      %p111 = scmp.ne.s32.totalorder %s94, %s110
      %p112 = scmp.eq.s32.totalorder %s25, 0
      %p113 = por %p111, %p112
      %s114 = ssub.s32 %s26, %s38
      %p115 = scmp.eq.s32.totalorder %s114, 0
      %s117 = sadd.s32 %s116, 1
      %s118 = scalar_select %p115, %s116, %s117
      %p121 = pneg %p115
      %p122 = scmp.eq.s32.totalorder %s19, 5
      %p123 = por %p121, %p122
      %p124 = scmp.ne.s32.totalorder %s116, %s119
      %p125 = scmp.eq.s32.totalorder %s19, 0
      %p126 = por %p124, %p125
      %p127 = scmp.ne.s32.totalorder %s116, %s119
      %p128 = scmp.eq.s32.totalorder %s24, 5
      %p129 = por %p127, %p128
      %p130 = scmp.ne.s32.totalorder %s119, %s120
      %p131 = scmp.eq.s32.totalorder %s24, 0
      %p132 = por %p130, %p131
      %p133 = scmp.ne.s32.totalorder %s119, %s120
      %p134 = scmp.eq.s32.totalorder %s25, 5
      %p135 = por %p133, %p134
      %p137 = scmp.ne.s32.totalorder %s120, %s136
      %p138 = scmp.eq.s32.totalorder %s25, 0
      %p139 = por %p137, %p138
      %s140 = ssub.s32 %s26, %s38
      %p141 = scmp.eq.s32.totalorder %s140, 0
      %s143 = sadd.s32 %s142, 1
      %s144 = scalar_select %p141, %s142, %s143
      %p147 = pneg %p141
      %p148 = scmp.eq.s32.totalorder %s19, 5
      %p149 = por %p147, %p148
      %p150 = scmp.ne.s32.totalorder %s142, %s145
      %p151 = scmp.eq.s32.totalorder %s19, 0
      %p152 = por %p150, %p151
      %p153 = scmp.ne.s32.totalorder %s142, %s145
      %p154 = scmp.eq.s32.totalorder %s24, 5
      %p155 = por %p153, %p154
      %p156 = scmp.ne.s32.totalorder %s145, %s146
      %p157 = scmp.eq.s32.totalorder %s24, 0
      %p158 = por %p156, %p157
      %p159 = scmp.ne.s32.totalorder %s145, %s146
      %p160 = scmp.eq.s32.totalorder %s25, 5
      %p161 = por %p159, %p160
      %p163 = scmp.ne.s32.totalorder %s146, %s162
      %p164 = scmp.eq.s32.totalorder %s25, 0
      %p165 = por %p163, %p164
      %s167 = sadd.s32 %s166, 1
      %p170 = scmp.eq.s32.totalorder %s19, 5
      %p171 = scmp.ne.s32.totalorder %s166, %s168
      %p172 = scmp.eq.s32.totalorder %s19, 0
      %p173 = por %p171, %p172
      %p174 = scmp.ne.s32.totalorder %s166, %s168
      %p175 = scmp.eq.s32.totalorder %s24, 5
      %p176 = por %p174, %p175
      %p177 = scmp.ne.s32.totalorder %s168, %s169
      %p178 = scmp.eq.s32.totalorder %s24, 0
      %p179 = por %p177, %p178
      %p180 = scmp.ne.s32.totalorder %s168, %s169
      %p181 = scmp.eq.s32.totalorder %s25, 5
      %p182 = por %p180, %p181
      %p184 = scmp.ne.s32.totalorder %s169, %s183
      %p185 = scmp.eq.s32.totalorder %s25, 0
      %p186 = por %p184, %p185
      %s188 = sadd.s32 %s187, 1
      %p191 = scmp.eq.s32.totalorder %s19, 5
      %p192 = scmp.ne.s32.totalorder %s187, %s189
      %p193 = scmp.eq.s32.totalorder %s19, 0
      %p194 = por %p192, %p193
      %p195 = scmp.ne.s32.totalorder %s187, %s189
      %p196 = scmp.eq.s32.totalorder %s24, 5
      %p197 = por %p195, %p196
      %p198 = scmp.ne.s32.totalorder %s189, %s190
      %p199 = scmp.eq.s32.totalorder %s24, 0
      %p200 = por %p198, %p199
      %p201 = scmp.ne.s32.totalorder %s189, %s190
      %p202 = scmp.eq.s32.totalorder %s25, 5
      %p203 = por %p201, %p202
      %p205 = scmp.ne.s32.totalorder %s190, %s204
      %p206 = scmp.eq.s32.totalorder %s25, 0
      %p207 = por %p205, %p206
      %s209 = sadd.s32 %s208, 1
      %p212 = scmp.eq.s32.totalorder %s19, 5
      %p213 = scmp.ne.s32.totalorder %s208, %s210
      %p214 = scmp.eq.s32.totalorder %s19, 0
      %p215 = por %p213, %p214
      %p216 = scmp.ne.s32.totalorder %s208, %s210
      %p217 = scmp.eq.s32.totalorder %s24, 5
      %p218 = por %p216, %p217
      %p219 = scmp.ne.s32.totalorder %s210, %s211
      %p220 = scmp.eq.s32.totalorder %s24, 0
      %p221 = por %p219, %p220
      %p222 = scmp.ne.s32.totalorder %s210, %s211
      %p223 = scmp.eq.s32.totalorder %s25, 5
      %p224 = por %p222, %p223
      %p226 = scmp.ne.s32.totalorder %s211, %s225
      %p227 = scmp.eq.s32.totalorder %s25, 0
      %p228 = por %p226, %p227
      %s229 = ssub.s32 %s26, %s38
      %s230 = ssub.s32 %s27, %s34
      %s231 = sor.u32 %s229, %s230
      %p232 = scmp.eq.s32.totalorder %s231, 0
      %s234 = sadd.s32 %s233, 1
      %s235 = scalar_select %p232, %s233, %s234
      %p238 = pneg %p232
      %p239 = scmp.eq.s32.totalorder %s19, 5
      %p240 = por %p238, %p239
      %p241 = scmp.ne.s32.totalorder %s233, %s236
      %p242 = scmp.eq.s32.totalorder %s19, 0
      %p243 = por %p241, %p242
      %p244 = scmp.ne.s32.totalorder %s233, %s236
      %p245 = scmp.eq.s32.totalorder %s24, 5
      %p246 = por %p244, %p245
      %p247 = scmp.ne.s32.totalorder %s236, %s237
      %p248 = scmp.eq.s32.totalorder %s24, 0
      %p249 = por %p247, %p248
      %p250 = scmp.ne.s32.totalorder %s236, %s237
      %p251 = scmp.eq.s32.totalorder %s25, 5
      %p252 = por %p250, %p251
      %p254 = scmp.ne.s32.totalorder %s237, %s253
      %p255 = scmp.eq.s32.totalorder %s25, 0
      %p256 = por %p254, %p255
      %s257 = ssub.s32 %s26, %s38
      %s258 = ssub.s32 %s27, %s34
      %s259 = sor.u32 %s257, %s258
      %p260 = scmp.eq.s32.totalorder %s259, 0
      %s262 = sadd.s32 %s261, 1
      %s263 = scalar_select %p260, %s261, %s262
      %p266 = pneg %p260
      %p267 = scmp.eq.s32.totalorder %s19, 5
      %p268 = por %p266, %p267
      %p269 = scmp.ne.s32.totalorder %s261, %s264
      %p270 = scmp.eq.s32.totalorder %s19, 0
      %p271 = por %p269, %p270
      %p272 = scmp.ne.s32.totalorder %s261, %s264
      %p273 = scmp.eq.s32.totalorder %s24, 5
      %p274 = por %p272, %p273
      %p275 = scmp.ne.s32.totalorder %s264, %s265
      %p276 = scmp.eq.s32.totalorder %s24, 0
      %p277 = por %p275, %p276
      %p278 = scmp.ne.s32.totalorder %s264, %s265
      %p279 = scmp.eq.s32.totalorder %s25, 5
      %p280 = por %p278, %p279
      %p282 = scmp.ne.s32.totalorder %s265, %s281
      %p283 = scmp.eq.s32.totalorder %s25, 0
      %p284 = por %p282, %p283
      %p285 = scmp.le.s32.totalorder 1, %s19
      %p286 = scmp.lt.s32.totalorder %s19, 7
      %p287 = pnand %p285, %p286
      %p288 = pneg %p287
      // Predicated region
      $region9: #{tpu_custom_call.1} parent=5 // pred_check
        _
      $region10: #{tpu_custom_call.1} parent=5 // pred_check_branch
        %290 = sbr.rel (%p287) target = $region12
      $region11: #{tpu_custom_call.1} parent=5 // pred_region
        %s291 = ssub.s32 %s19, 1
        // Predicated region
        $region13: #{tpu_custom_call.1} parent=11 // pred_check
          %p292 = pneg %p80
        $region14: #{tpu_custom_call.1} parent=11 // pred_check_branch
          %294 = sbr.rel (%p292) target = $region16
        $region15: #{tpu_custom_call.1} parent=11 // pred_region
          _
        $region16: #{tpu_custom_call.1} parent=11 // pred_fallthru
          _
        // Predicated region
        $region17: #{tpu_custom_call.1} parent=11 // pred_check
          %p295 = pneg %p179
        $region18: #{tpu_custom_call.1} parent=11 // pred_check_branch
          %297 = sbr.rel (%p295) target = $region20
        $region19: #{tpu_custom_call.1} parent=11 // pred_region
          _
        $region20: #{tpu_custom_call.1} parent=11 // pred_fallthru
          _
        // Predicated region
        $region21: #{tpu_custom_call.1} parent=11 // pred_check
          %p298 = pneg %p200
        $region22: #{tpu_custom_call.1} parent=11 // pred_check_branch
          %300 = sbr.rel (%p298) target = $region24
        $region23: #{tpu_custom_call.1} parent=11 // pred_region
          _
        $region24: #{tpu_custom_call.1} parent=11 // pred_fallthru
          _
        // Predicated region
        $region25: #{tpu_custom_call.1} parent=11 // pred_check
          %p301 = pneg %p221
        $region26: #{tpu_custom_call.1} parent=11 // pred_check_branch
          %303 = sbr.rel (%p301) target = $region28
        $region27: #{tpu_custom_call.1} parent=11 // pred_region
          _
        $region28: #{tpu_custom_call.1} parent=11 // pred_fallthru
          _
      $region12: #{tpu_custom_call.1} parent=5 // pred_fallthru
        _
      %p304 = scmp.lt.s32.totalorder %s19, 6
      // Predicated region
      $region29: #{tpu_custom_call.1} parent=5 // pred_check
        %p305 = pneg %p304
      $region30: #{tpu_custom_call.1} parent=5 // pred_check_branch
        %307 = sbr.rel (%p305) target = $region32
      $region31: #{tpu_custom_call.1} parent=5 // pred_region
        // Predicated region
        $region33: #{tpu_custom_call.1} parent=31 // pred_check
          %p308 = pneg %p53
        $region34: #{tpu_custom_call.1} parent=31 // pred_check_branch
          %310 = sbr.rel (%p308) target = $region36
        $region35: #{tpu_custom_call.1} parent=31 // pred_region
          %p311 = scmp.lt.s32.totalorder %s26, 2
          %s312 = scalar_select %p311, %s26, 2
          %p313 = scmp.lt.s32.totalorder %s27, 1
          %s314 = scalar_select %p313, %s27, 1
          %s315 = smul.addr %s312, 2
          %s316 = sadd.s32 %s314, %s315
          %s317 = smul.addr %s316, 8
          %s318 = scalar_lea.vmem %s0, %s317
        $region36: #{tpu_custom_call.1} parent=31 // pred_fallthru
          _
        // Predicated region
        $region37: #{tpu_custom_call.1} parent=31 // pred_check
          %p319 = pneg %p100
        $region38: #{tpu_custom_call.1} parent=31 // pred_check_branch
          %321 = sbr.rel (%p319) target = $region40
        $region39: #{tpu_custom_call.1} parent=31 // pred_region
          %p322 = scmp.lt.s32.totalorder %s26, 2
          %s323 = scalar_select %p322, %s26, 2
          %s324 = smul.addr %s323, 2
          %s325 = smul.addr %s324, 8
          %s326 = scalar_lea.vmem %s2, %s325
        $region40: #{tpu_custom_call.1} parent=31 // pred_fallthru
          _
        // Predicated region
        $region41: #{tpu_custom_call.1} parent=31 // pred_check
          %p327 = pneg %p126
        $region42: #{tpu_custom_call.1} parent=31 // pred_check_branch
          %329 = sbr.rel (%p327) target = $region44
        $region43: #{tpu_custom_call.1} parent=31 // pred_region
          %p330 = scmp.lt.s32.totalorder %s26, 2
          %s331 = scalar_select %p330, %s26, 2
          %s332 = smul.addr %s331, 8
          %s333 = smul.addr %s332, 8
          %s334 = scalar_lea.vmem %s3, %s333
        $region44: #{tpu_custom_call.1} parent=31 // pred_fallthru
          _
        // Predicated region
        $region45: #{tpu_custom_call.1} parent=31 // pred_check
          %p335 = pneg %p152
        $region46: #{tpu_custom_call.1} parent=31 // pred_check_branch
          %337 = sbr.rel (%p335) target = $region48
        $region47: #{tpu_custom_call.1} parent=31 // pred_region
          %p338 = scmp.lt.s32.totalorder %s26, 2
          %s339 = scalar_select %p338, %s26, 2
          %s340 = scalar_lea.vmem %s4, %s339
        $region48: #{tpu_custom_call.1} parent=31 // pred_fallthru
          _
      $region32: #{tpu_custom_call.1} parent=5 // pred_fallthru
        _
      %p341 = scmp.le.s32.totalorder 1, %s19
      %p342 = scmp.lt.s32.totalorder %s19, 7
      %p343 = pnand %p341, %p342
      %p344 = pneg %p343
      // Predicated region
      $region49: #{tpu_custom_call.1} parent=5 // pred_check
        _
      $region50: #{tpu_custom_call.1} parent=5 // pred_check_branch
        %346 = sbr.rel (%p343) target = $region52
      $region51: #{tpu_custom_call.1} parent=5 // pred_region
        %s347 = ssub.s32 %s19, 1
        %p348 = scmp.lt.s32.totalorder %s28, 2
        %s349 = scalar_select %p348, %s28, 2
        %p350 = scmp.lt.s32.totalorder %s29, 1
        %s351 = scalar_select %p350, %s29, 1
        %s352 = smul.addr %s349, 2
        %s353 = sadd.s32 %s351, %s352
        %s354 = smul.addr %s353, 8
        %s355 = scalar_lea.vmem %s0, %s354
        %p356 = pneg %p59
        %p357 = pneg %p56
        %p358 = pneg %p80
        %p359 = pneg %p77
        %p360 = scmp.lt.s32.totalorder %s28, 2
        %s361 = scalar_select %p360, %s28, 2
        %s362 = smul.addr %s361, 2
        %s363 = smul.addr %s362, 8
        %s364 = scalar_lea.vmem %s2, %s363
        %p365 = pneg %p106
        %p366 = pneg %p103
        %p367 = scmp.lt.s32.totalorder %s28, 2
        %s368 = scalar_select %p367, %s28, 2
        %s369 = smul.addr %s368, 8
        %s370 = smul.addr %s369, 8
        %s371 = scalar_lea.vmem %s3, %s370
        %p372 = pneg %p132
        %p373 = pneg %p129
        %p374 = scmp.lt.s32.totalorder %s28, 2
        %s375 = scalar_select %p374, %s28, 2
        %s376 = scalar_lea.vmem %s4, %s375
        %p377 = pneg %p158
        %p378 = pneg %p155
        %p379 = pneg %p179
        %p380 = pneg %p176
        %p381 = pneg %p200
        %p382 = pneg %p197
        %p383 = pneg %p221
        %p384 = pneg %p218
        %p385 = pneg %p249
        %p386 = pneg %p246
        %s387 = sand.u32 %s236, 1
        %s388 = scalar_lea.sflag [#allocation6], %s387
        %s389 = sand.u32 %s236, 1
        %s390 = smul.addr %s389, 32
        %s391 = scalar_lea.vmem [#allocation5], %s390
        %p392 = pneg %p277
        %p393 = pneg %p274
        %s394 = smul.u32 4, %s29
        %p395 = scmp.lt.s32.totalorder %s28, 2
        %s396 = scalar_select %p395, %s28, 2
        %p397 = scmp.lt.s32.totalorder %s394, 7
        %s398 = scalar_select %p397, %s394, 7
        %s399 = smul.addr %s396, 8
        %s400 = sadd.s32 %s398, %s399
        %s401 = smul.addr %s400, 8
        %s402 = scalar_lea.vmem %s9, %s401
        %p403 = scmp.lt.s32.totalorder %s28, 2
        %s404 = scalar_select %p403, %s28, 2
        %p405 = scmp.lt.s32.totalorder %s29, 1
        %s406 = scalar_select %p405, %s29, 1
        %s407 = smul.addr %s404, 2
        %s408 = sadd.s32 %s406, %s407
        %s409 = smul.addr %s408, 8
        %s410 = scalar_lea.vmem %s0, %s409
        %p411 = scmp.lt.s32.totalorder %s28, 2
        %s412 = scalar_select %p411, %s28, 2
        %s413 = smul.addr %s412, 2
        %s414 = smul.addr %s413, 8
        %s415 = scalar_lea.vmem %s2, %s414
        %p416 = scmp.lt.s32.totalorder %s28, 2
        %s417 = scalar_select %p416, %s28, 2
        %s418 = smul.addr %s417, 8
        %s419 = smul.addr %s418, 8
        %s420 = scalar_lea.vmem %s3, %s419
        %p421 = scmp.lt.s32.totalorder %s28, 2
        %s422 = scalar_select %p421, %s28, 2
        %s423 = scalar_lea.vmem %s4, %s422
        %s424 = smul.u32 4, %s29
        %s425 = smul.u32 4, %s29
        %p426 = scmp.lt.s32.totalorder %s28, 2
        %s427 = scalar_select %p426, %s28, 2
        %p428 = scmp.lt.s32.totalorder %s425, 7
        %s429 = scalar_select %p428, %s425, 7
        %s430 = smul.addr %s427, 8
        %s431 = sadd.s32 %s429, %s430
        %s432 = smul.addr %s431, 8
        %s433 = scalar_lea.vmem %s9, %s432
        %s434 = smul.u32 4, %s29
        %p435 = scmp.eq.s32.totalorder %s29, 0
        // Predicated region
        $region53: #{tpu_custom_call.1} parent=51 // pred_check
          %p436 = pneg %p435
        $region54: #{tpu_custom_call.1} parent=51 // pred_check_branch
          %438 = sbr.rel (%p436) target = $region56
        $region55: #{tpu_custom_call.1} parent=51 // pred_region
          %v439 = vld [vmem:[%s1] sm:$0xff]
          %v440 = vld [vmem:[%s1 + $0x8] sm:$0xff]
          %v441 = vld [vmem:[%s1 + $0x10] sm:$0xff]
          %v442 = vld [vmem:[%s1 + $0x18] sm:$0xff]
          %v443 = vld [vmem:[%s1 + $0x20] sm:$0xff]
          %v444 = vld [vmem:[%s1 + $0x28] sm:$0xff]
          %v445 = vld [vmem:[%s1 + $0x30] sm:$0xff]
          %v446 = vld [vmem:[%s1 + $0x38] sm:$0xff]
          %v447 = vld [vmem:[%s415] sm:$0xff]
          %v448 = vld [vmem:[%s415 + $0x8] sm:$0xff]
          %vm449 = vcmask 130048
          %v451 = vsel %vm449, %v439, 0
          %v454 = vsel %vm449, %v440, 0
          %v457 = vsel %vm449, %v441, 0
          %v460 = vsel %vm449, %v442, 0
          %v463 = vsel %vm449, %v443, 0
          %v466 = vsel %vm449, %v444, 0
          %v469 = vsel %vm449, %v445, 0
          %v472 = vsel %vm449, %v446, 0
          %474 = vmatprep.subr.mxu0 0.0
          %475 = vmatpush1.msra.mxu0 %v447
          %476 = vmatprep.subr.mxu0 0.0
          %477 = vmatpush1.msra.mxu0 %v448
          %478 = vmatprep.subr.mxu0 0.0
          %479 = vmatpush1.msra.mxu0 0.0
          %480 = vmatprep.subr.mxu0 0.0
          %481 = vmatpush1.msra.mxu0 0.0
          %482 = vmatprep.subr.mxu0 0.0
          %483 = vmatpush1.msra.mxu0 0.0
          %484 = vmatprep.subr.mxu0 0.0
          %485 = vmatpush1.msra.mxu0 0.0
          %486 = vmatprep.subr.mxu0 0.0
          %487 = vmatpush1.msra.mxu0 0.0
          %488 = vmatprep.subr.mxu0 0.0
          %489 = vmatpush1.msra.mxu0 0.0
          %490 = vmatprep.subr.mxu0 0.0
          %491 = vmatpush1.msra.mxu0 0.0
          %492 = vmatprep.subr.mxu0 0.0
          %493 = vmatpush1.msra.mxu0 0.0
          %494 = vmatprep.subr.mxu0 0.0
          %495 = vmatpush1.msra.mxu0 0.0
          %496 = vmatprep.subr.mxu0 0.0
          %497 = vmatpush1.msra.mxu0 0.0
          %498 = vmatprep.subr.mxu0 0.0
          %499 = vmatpush1.msra.mxu0 0.0
          %500 = vmatprep.subr.mxu0 0.0
          %501 = vmatpush1.msra.mxu0 0.0
          %502 = vmatprep.subr.mxu0 0.0
          %503 = vmatpush1.msra.mxu0 0.0
          %504 = vmatprep.subr.mxu0 0.0
          %505 = vmatpush1.msra.mxu0 0.0
          %506 = vmatprep.subr.mxu0 0.0
          %507 = vmatpush1.msra.mxu0 0.0
          %508 = vmatprep.subr.mxu0 0.0
          %509 = vmatpush1.msra.mxu0 0.0
          %510 = vmatprep.subr.mxu0 0.0
          %511 = vmatpush1.msra.mxu0 0.0
          %512 = vmatprep.subr.mxu0 0.0
          %513 = vmatpush1.msra.mxu0 0.0
          %514 = vmatprep.subr.mxu0 0.0
          %515 = vmatpush1.msra.mxu0 0.0
          %516 = vmatprep.subr.mxu0 0.0
          %517 = vmatpush1.msra.mxu0 0.0
          %518 = vmatprep.subr.mxu0 0.0
          %519 = vmatpush1.msra.mxu0 0.0
          %520 = vmatprep.subr.mxu0 0.0
          %521 = vmatpush1.msra.mxu0 0.0
          %522 = vmatprep.subr.mxu0 0.0
          %523 = vmatpush1.msra.mxu0 0.0
          %524 = vmatprep.subr.mxu0 0.0
          %525 = vmatpush1.msra.mxu0 0.0
          %526 = vmatprep.subr.mxu0 0.0
          %527 = vmatpush1.msra.mxu0 0.0
          %528 = vmatprep.subr.mxu0 0.0
          %529 = vmatpush1.msra.mxu0 0.0
          %530 = vmatprep.subr.mxu0 0.0
          %531 = vmatpush1.msra.mxu0 0.0
          %532 = vmatprep.subr.mxu0 0.0
          %533 = vmatpush1.msra.mxu0 0.0
          %534 = vmatprep.subr.mxu0 0.0
          %535 = vmatpush1.msra.mxu0 0.0
          %536 = vmatprep.subr.mxu0 0.0
          %537 = vmatpush1.msra.mxu0 0.0
          %538 = vmatprep.mubr.f32.mxu0 0.0
          %539 = vmatmul.mubr.f32.gmra.mrb[0].mxu0 %v451
          %v540 = vpop.f32.mrb[0].mxu0
          %v541 = vadd.f32 0.0, %v540
          %v542 = vpop.f32.mrb[0].mxu0
          %543 = vmatprep.mubr.f32.mxu0 0.0
          %544 = vmatmul.mubr.f32.gmra.mrb[0].mxu0 %v454
          %v545 = vpop.f32.mrb[0].mxu0
          %v546 = vadd.f32 0.0, %v545
          %v547 = vpop.f32.mrb[0].mxu0
          %548 = vmatprep.mubr.f32.mxu0 0.0
          %549 = vmatmul.mubr.f32.gmra.mrb[0].mxu0 %v457
          %v550 = vpop.f32.mrb[0].mxu0
          %v551 = vadd.f32 0.0, %v550
          %v552 = vpop.f32.mrb[0].mxu0
          %553 = vmatprep.mubr.f32.mxu0 0.0
          %554 = vmatmul.mubr.f32.gmra.mrb[0].mxu0 %v460
          %v555 = vpop.f32.mrb[0].mxu0
          %v556 = vadd.f32 0.0, %v555
          %v557 = vpop.f32.mrb[0].mxu0
          %558 = vmatprep.mubr.f32.mxu0 0.0
          %559 = vmatmul.mubr.f32.gmra.mrb[0].mxu0 %v463
          %v560 = vpop.f32.mrb[0].mxu0
          %v561 = vadd.f32 0.0, %v560
          %v562 = vpop.f32.mrb[0].mxu0
          %563 = vmatprep.mubr.f32.mxu0 0.0
          %564 = vmatmul.mubr.f32.gmra.mrb[0].mxu0 %v466
          %v565 = vpop.f32.mrb[0].mxu0
          %v566 = vadd.f32 0.0, %v565
          %v567 = vpop.f32.mrb[0].mxu0
          %568 = vmatprep.mubr.f32.mxu0 0.0
          %569 = vmatmul.mubr.f32.gmra.mrb[0].mxu0 %v469
          %v570 = vpop.f32.mrb[0].mxu0
          %v571 = vadd.f32 0.0, %v570
          %v572 = vpop.f32.mrb[0].mxu0
          %573 = vmatprep.mubr.f32.mxu0 0.0
          %574 = vmatmul.mubr.f32.gmra.mrb[0].mxu0 %v472
          %v575 = vpop.f32.mrb[0].mxu0
          %v576 = vadd.f32 0.0, %v575
          %v577 = vpop.f32.mrb[0].mxu0
          %578 = vdwg.mxu0
          %vm579 = vcmask 523264
          %580 = vst.msk [vmem:[#allocation2] sm:$0xff] %vm579, %v541
          %581 = vst.msk [vmem:[#allocation2 + $0x8] sm:$0xff] %vm579, %v546
          %582 = vst.msk [vmem:[#allocation2 + $0x10] sm:$0xff] %vm579, %v551
          %583 = vst.msk [vmem:[#allocation2 + $0x18] sm:$0xff] %vm579, %v556
          %584 = vst.msk [vmem:[#allocation2 + $0x20] sm:$0xff] %vm579, %v561
          %585 = vst.msk [vmem:[#allocation2 + $0x28] sm:$0xff] %vm579, %v566
          %586 = vst.msk [vmem:[#allocation2 + $0x30] sm:$0xff] %vm579, %v571
          %587 = vst.msk [vmem:[#allocation2 + $0x38] sm:$0xff] %vm579, %v576
          %v588 = vld [vmem:[%s420] sm:$0xff]
          %v589 = vld [vmem:[%s420 + $0x8] sm:$0xff]
          %v590 = vld [vmem:[%s420 + $0x10] sm:$0xff]
          %v591 = vld [vmem:[%s420 + $0x18] sm:$0xff]
          %v592 = vld [vmem:[%s420 + $0x20] sm:$0xff]
          %v593 = vld [vmem:[%s420 + $0x28] sm:$0xff]
          %v594 = vld [vmem:[%s420 + $0x30] sm:$0xff]
          %v595 = vld [vmem:[%s420 + $0x38] sm:$0xff]
          %v597 = vsel %vm579, %v541, 0
          %v600 = vsel %vm579, %v546, 0
          %v603 = vsel %vm579, %v551, 0
          %v606 = vsel %vm579, %v556, 0
          %v609 = vsel %vm579, %v561, 0
          %v612 = vsel %vm579, %v566, 0
          %v615 = vsel %vm579, %v571, 0
          %v618 = vsel %vm579, %v576, 0
          %620 = vmatprep.subr.mxu0 0.0
          %621 = vmatpush1.msra.mxu0 %v588
          %622 = vmatprep.subr.mxu0 0.0
          %623 = vmatpush1.msra.mxu0 %v589
          %624 = vmatprep.subr.mxu0 0.0
          %625 = vmatpush1.msra.mxu0 %v590
          %626 = vmatprep.subr.mxu0 0.0
          %627 = vmatpush1.msra.mxu0 %v591
          %628 = vmatprep.subr.mxu0 0.0
          %629 = vmatpush1.msra.mxu0 %v592
          %630 = vmatprep.subr.mxu0 0.0
          %631 = vmatpush1.msra.mxu0 %v593
          %632 = vmatprep.subr.mxu0 0.0
          %633 = vmatpush1.msra.mxu0 %v594
          %634 = vmatprep.subr.mxu0 0.0
          %635 = vmatpush1.msra.mxu0 %v595
          %636 = vmatprep.subr.mxu0 0.0
          %637 = vmatpush1.msra.mxu0 0.0
          %638 = vmatprep.subr.mxu0 0.0
          %639 = vmatpush1.msra.mxu0 0.0
          %640 = vmatprep.subr.mxu0 0.0
          %641 = vmatpush1.msra.mxu0 0.0
          %642 = vmatprep.subr.mxu0 0.0
          %643 = vmatpush1.msra.mxu0 0.0
          %644 = vmatprep.subr.mxu0 0.0
          %645 = vmatpush1.msra.mxu0 0.0
          %646 = vmatprep.subr.mxu0 0.0
          %647 = vmatpush1.msra.mxu0 0.0
          %648 = vmatprep.subr.mxu0 0.0
          %649 = vmatpush1.msra.mxu0 0.0
          %650 = vmatprep.subr.mxu0 0.0
          %651 = vmatpush1.msra.mxu0 0.0
          %652 = vmatprep.subr.mxu0 0.0
          %653 = vmatpush1.msra.mxu0 0.0
          %654 = vmatprep.subr.mxu0 0.0
          %655 = vmatpush1.msra.mxu0 0.0
          %656 = vmatprep.subr.mxu0 0.0
          %657 = vmatpush1.msra.mxu0 0.0
          %658 = vmatprep.subr.mxu0 0.0
          %659 = vmatpush1.msra.mxu0 0.0
          %660 = vmatprep.subr.mxu0 0.0
          %661 = vmatpush1.msra.mxu0 0.0
          %662 = vmatprep.subr.mxu0 0.0
          %663 = vmatpush1.msra.mxu0 0.0
          %664 = vmatprep.subr.mxu0 0.0
          %665 = vmatpush1.msra.mxu0 0.0
          %666 = vmatprep.subr.mxu0 0.0
          %667 = vmatpush1.msra.mxu0 0.0
          %668 = vmatprep.subr.mxu0 0.0
          %669 = vmatpush1.msra.mxu0 0.0
          %670 = vmatprep.subr.mxu0 0.0
          %671 = vmatpush1.msra.mxu0 0.0
          %672 = vmatprep.subr.mxu0 0.0
          %673 = vmatpush1.msra.mxu0 0.0
          %674 = vmatprep.subr.mxu0 0.0
          %675 = vmatpush1.msra.mxu0 0.0
          %676 = vmatprep.subr.mxu0 0.0
          %677 = vmatpush1.msra.mxu0 0.0
          %678 = vmatprep.subr.mxu0 0.0
          %679 = vmatpush1.msra.mxu0 0.0
          %680 = vmatprep.subr.mxu0 0.0
          %681 = vmatpush1.msra.mxu0 0.0
          %682 = vmatprep.subr.mxu0 0.0
          %683 = vmatpush1.msra.mxu0 0.0
          %684 = vmatprep.mubr.f32.mxu0 0.0
          %685 = vmatmul.mubr.f32.gmra.mrb[0].mxu0 %v597
          %v686 = vpop.f32.mrb[0].mxu0
          %v687 = vadd.f32 0.0, %v686
          %v688 = vpop.f32.mrb[0].mxu0
          %689 = vmatprep.mubr.f32.mxu0 0.0
          %690 = vmatmul.mubr.f32.gmra.mrb[0].mxu0 %v600
          %v691 = vpop.f32.mrb[0].mxu0
          %v692 = vadd.f32 0.0, %v691
          %v693 = vpop.f32.mrb[0].mxu0
          %694 = vmatprep.mubr.f32.mxu0 0.0
          %695 = vmatmul.mubr.f32.gmra.mrb[0].mxu0 %v603
          %v696 = vpop.f32.mrb[0].mxu0
          %v697 = vadd.f32 0.0, %v696
          %v698 = vpop.f32.mrb[0].mxu0
          %699 = vmatprep.mubr.f32.mxu0 0.0
          %700 = vmatmul.mubr.f32.gmra.mrb[0].mxu0 %v606
          %v701 = vpop.f32.mrb[0].mxu0
          %v702 = vadd.f32 0.0, %v701
          %v703 = vpop.f32.mrb[0].mxu0
          %704 = vmatprep.mubr.f32.mxu0 0.0
          %705 = vmatmul.mubr.f32.gmra.mrb[0].mxu0 %v609
          %v706 = vpop.f32.mrb[0].mxu0
          %v707 = vadd.f32 0.0, %v706
          %v708 = vpop.f32.mrb[0].mxu0
          %709 = vmatprep.mubr.f32.mxu0 0.0
          %710 = vmatmul.mubr.f32.gmra.mrb[0].mxu0 %v612
          %v711 = vpop.f32.mrb[0].mxu0
          %v712 = vadd.f32 0.0, %v711
          %v713 = vpop.f32.mrb[0].mxu0
          %714 = vmatprep.mubr.f32.mxu0 0.0
          %715 = vmatmul.mubr.f32.gmra.mrb[0].mxu0 %v615
          %v716 = vpop.f32.mrb[0].mxu0
          %v717 = vadd.f32 0.0, %v716
          %v718 = vpop.f32.mrb[0].mxu0
          %719 = vmatprep.mubr.f32.mxu0 0.0
          %720 = vmatmul.mubr.f32.gmra.mrb[0].mxu0 %v618
          %v721 = vpop.f32.mrb[0].mxu0
          %v722 = vadd.f32 0.0, %v721
          %v723 = vpop.f32.mrb[0].mxu0
          %724 = vdwg.mxu0
          %733 = vrot.lane.b32.xlu0 %v687, 124
          %v734 = vpop.permute.xlu0 %733
          %735 = vrot.lane.b32.xlu0 %v692, 124
          %v736 = vpop.permute.xlu0 %735
          %737 = vrot.lane.b32.xlu0 %v697, 124
          %v738 = vpop.permute.xlu0 %737
          %739 = vrot.lane.b32.xlu0 %v702, 124
          %v740 = vpop.permute.xlu0 %739
          %741 = vrot.lane.b32.xlu0 %v707, 124
          %v742 = vpop.permute.xlu0 %741
          %743 = vrot.lane.b32.xlu0 %v712, 124
          %v744 = vpop.permute.xlu0 %743
          %745 = vrot.lane.b32.xlu0 %v717, 124
          %v746 = vpop.permute.xlu0 %745
          %747 = vrot.lane.b32.xlu0 %v722, 124
          %v748 = vpop.permute.xlu0 %747
          %vm757 = vcmask 31744
          %758 = vst.msk [vmem:[#allocation4] sm:$0xff] %vm757, %v734
          %759 = vst.msk [vmem:[#allocation4 + $0x8] sm:$0xff] %vm757, %v736
          %760 = vst.msk [vmem:[#allocation4 + $0x10] sm:$0xff] %vm757, %v738
          %761 = vst.msk [vmem:[#allocation4 + $0x18] sm:$0xff] %vm757, %v740
          %762 = vst.msk [vmem:[#allocation4 + $0x20] sm:$0xff] %vm757, %v742
          %763 = vst.msk [vmem:[#allocation4 + $0x28] sm:$0xff] %vm757, %v744
          %764 = vst.msk [vmem:[#allocation4 + $0x30] sm:$0xff] %vm757, %v746
          %765 = vst.msk [vmem:[#allocation4 + $0x38] sm:$0xff] %vm757, %v748
          %766 = vxpose.xlu0.b32.start [1/16] %v687, 128
          %767 = vxpose.xlu0.b32.cont [2/16] %v692, 128
          %768 = vxpose.xlu0.b32.cont [3/16] %v697, 128
          %769 = vxpose.xlu0.b32.cont [4/16] %v702, 128
          %770 = vxpose.xlu0.b32.cont [5/16] %v707, 128
          %771 = vxpose.xlu0.b32.cont [6/16] %v712, 128
          %772 = vxpose.xlu0.b32.cont [7/16] %v717, 128
          %773 = vxpose.xlu0.b32.cont [8/16] %v722, 128
          %774 = vxpose.xlu0.b32.cont [9/16] 0.0, 128
          %775 = vxpose.xlu0.b32.cont [10/16] 0.0, 128
          %776 = vxpose.xlu0.b32.cont [11/16] 0.0, 128
          %777 = vxpose.xlu0.b32.cont [12/16] 0.0, 128
          %778 = vxpose.xlu0.b32.cont [13/16] 0.0, 128
          %779 = vxpose.xlu0.b32.cont [14/16] 0.0, 128
          %780 = vxpose.xlu0.b32.cont [15/16] 0.0, 128
          %781 = vxpose.xlu0.b32.end [16/16] 0.0, 128
          %v782 = vpop.trf.xlu0
          %v783 = vpop.trf.xlu0
          %v784 = vpop.trf.xlu0
          %v785 = vpop.trf.xlu0
          %v786 = vpop.trf.xlu0
          %v787 = vpop.trf.xlu0
          %v788 = vpop.trf.xlu0
          %v789 = vpop.trf.xlu0
          %v790 = vpop.trf.xlu0
          %v791 = vpop.trf.xlu0
          %v792 = vpop.trf.xlu0
          %v793 = vpop.trf.xlu0
          %v794 = vpop.trf.xlu0
          %v795 = vpop.trf.xlu0
          %v796 = vpop.trf.xlu0
          %v797 = vpop.trf.xlu0
          %vm798 = vcmask 519168
          %799 = vst.msk [vmem:[#allocation3] sm:$0xf] %vm798, %v782
        $region56: #{tpu_custom_call.1} parent=51 // pred_fallthru
          _
        %v800 = vld [vmem:[#allocation2] sm:$0xff]
        %v801 = vld [vmem:[#allocation2 + $0x8] sm:$0xff]
        %v802 = vld [vmem:[#allocation2 + $0x10] sm:$0xff]
        %v803 = vld [vmem:[#allocation2 + $0x18] sm:$0xff]
        %v804 = vld [vmem:[#allocation2 + $0x20] sm:$0xff]
        %v805 = vld [vmem:[#allocation2 + $0x28] sm:$0xff]
        %v806 = vld [vmem:[#allocation2 + $0x30] sm:$0xff]
        %v807 = vld [vmem:[#allocation2 + $0x38] sm:$0xff]
        %v808 = vld [vmem:[#allocation3] sm:$0xf]
        %s809 = smul.u32 %s29, 32
        %s810 = scalar_lea.vmem [#allocation4], %s809
        %v811 = vld [vmem:[%s810] sm:$0xff]
        %v812 = vld [vmem:[%s810 + $0x8] sm:$0xff]
        %v813 = vld [vmem:[%s810 + $0x10] sm:$0xff]
        %v814 = vld [vmem:[%s810 + $0x18] sm:$0xff]
        %v815 = vld [vmem:[%s410] sm:$0xff]
        %v816 = vunpack.c.0.s8 %v815
        %v817 = vunpack.c.1.s8 %v815
        %v818 = vunpack.c.2.s8 %v815
        %v819 = vunpack.c.3.s8 %v815
        %v820 = vcvt.s32.f32 %v816
        %v821 = vcvt.s32.f32 %v817
        %v822 = vcvt.s32.f32 %v818
        %v823 = vcvt.s32.f32 %v819
        %vm824 = vcmp.gt.f32.partialorder %v820, 0.5
        %vm825 = vcmp.gt.f32.partialorder %v821, 0.5
        %vm826 = vcmp.gt.f32.partialorder %v822, 0.5
        %vm827 = vcmp.gt.f32.partialorder %v823, 0.5
        %v828 = vsel %vm824, 0.0, -1e+09
        %v829 = vsel %vm825, 0.0, -1e+09
        %v830 = vsel %vm826, 0.0, -1e+09
        %v831 = vsel %vm827, 0.0, -1e+09
        %v832 = vld [vmem:[%s423] sm:$0x1]
        %834 = vset.pattern.permute.xlu0 0
        %835 = vperm.xlu0 %834, %v811
        %v836 = vpop.permute.xlu0 %835
        %839 = vset.pattern.permute.xlu0 0
        %840 = vperm.xlu0 %839, %v812
        %v841 = vpop.permute.xlu0 %840
        %844 = vset.pattern.permute.xlu0 0
        %845 = vperm.xlu0 %844, %v813
        %v846 = vpop.permute.xlu0 %845
        %849 = vset.pattern.permute.xlu0 0
        %850 = vperm.xlu0 %849, %v814
        %v851 = vpop.permute.xlu0 %850
        %v853 = vlaneseq
        %v854 = vshrl.u32 %v853, 7
        %v855 = vsub.s32 0, %v854
        %v856 = vrot.slane %v808, %v855
        %v857 = vadd.f32 %v836, %v856
        %v858 = vadd.f32 %v841, %v856
        %v859 = vadd.f32 %v846, %v856
        %v860 = vadd.f32 %v851, %v856
        %vm861 = vcmp.gt.f32.partialorder %v857, 0.0
        %vm862 = vcmp.gt.f32.partialorder %v858, 0.0
        %vm863 = vcmp.gt.f32.partialorder %v859, 0.0
        %vm864 = vcmp.gt.f32.partialorder %v860, 0.0
        %v865 = vmul.f32 %v857, 0.2
        %v866 = vmul.f32 %v858, 0.2
        %v867 = vmul.f32 %v859, 0.2
        %v868 = vmul.f32 %v860, 0.2
        %v869 = vsel %vm861, %v857, %v865
        %v870 = vsel %vm862, %v858, %v866
        %v871 = vsel %vm863, %v859, %v867
        %v872 = vsel %vm864, %v860, %v868
        %v873 = vadd.f32 %v869, %v828
        %v874 = vadd.f32 %v870, %v829
        %v875 = vadd.f32 %v871, %v830
        %v876 = vadd.f32 %v872, %v831
        %vm877 = vcmask 523264
        %v878 = vsel %vm877, %v873, -inf
        %879 = vmax.xlane.f32.xlu0 %v878
        %v880 = vpop.xlane.xlu0 %879
        %v881 = vsel %vm877, %v874, -inf
        %882 = vmax.xlane.f32.xlu0 %v881
        %v883 = vpop.xlane.xlu0 %882
        %v884 = vsel %vm877, %v875, -inf
        %885 = vmax.xlane.f32.xlu0 %v884
        %v886 = vpop.xlane.xlu0 %885
        %v887 = vsel %vm877, %v876, -inf
        %888 = vmax.xlane.f32.xlu0 %v887
        %v889 = vpop.xlane.xlu0 %888
        %v890 = vsub.f32 %v873, %v880
        %v891 = vsub.f32 %v874, %v883
        %v892 = vsub.f32 %v875, %v886
        %v893 = vsub.f32 %v876, %v889
        %v894 = vmul.f32 %v890, 1.442695
        %v895 = vpow.pop %v894
        %v896 = vmul.f32 %v891, 1.442695
        %v897 = vpow.pop %v896
        %v898 = vmul.f32 %v892, 1.442695
        %v899 = vpow.pop %v898
        %v900 = vmul.f32 %v893, 1.442695
        %v901 = vpow.pop %v900
        %v902 = vsel %vm877, %v895, 0.0
        %903 = vadd.xlane.f32.xlu0 %v902
        %v904 = vpop.xlane.xlu0 %903
        %v905 = vsel %vm877, %v897, 0.0
        %906 = vadd.xlane.f32.xlu0 %v905
        %v907 = vpop.xlane.xlu0 %906
        %v908 = vsel %vm877, %v899, 0.0
        %909 = vadd.xlane.f32.xlu0 %v908
        %v910 = vpop.xlane.xlu0 %909
        %v911 = vsel %vm877, %v901, 0.0
        %912 = vadd.xlane.f32.xlu0 %v911
        %v913 = vpop.xlane.xlu0 %912
        %v914 = vmax.f32 %v904, 1e-30
        %v915 = vmax.f32 %v907, 1e-30
        %v916 = vmax.f32 %v910, 1e-30
        %v917 = vmax.f32 %v913, 1e-30
        %v918 = vrcp.pop %v914
        %v919 = vrcp.pop %v915
        %v920 = vrcp.pop %v916
        %v921 = vrcp.pop %v917
        %v922 = vmul.f32 %v895, %v918
        %v923 = vmul.f32 %v897, %v919
        %v924 = vmul.f32 %v899, %v920
        %v925 = vmul.f32 %v901, %v921
        %v927 = vlaneseq
        %v928 = vshrl.u32 %v927, 7
        %v929 = vsub.s32 0, %v928
        %v930 = vrot.slane %v832, %v929
        %v933 = vsel %vm877, %v922, 0
        %v936 = vsel %vm877, %v923, 0
        %v939 = vsel %vm877, %v924, 0
        %v942 = vsel %vm877, %v925, 0
        %944 = vmatprep.subr.mxu0 0.0
        %945 = vmatpush1.msra.mxu0 %v800
        %946 = vmatprep.subr.mxu0 0.0
        %947 = vmatpush1.msra.mxu0 %v801
        %948 = vmatprep.subr.mxu0 0.0
        %949 = vmatpush1.msra.mxu0 %v802
        %950 = vmatprep.subr.mxu0 0.0
        %951 = vmatpush1.msra.mxu0 %v803
        %952 = vmatprep.subr.mxu0 0.0
        %953 = vmatpush1.msra.mxu0 %v804
        %954 = vmatprep.subr.mxu0 0.0
        %955 = vmatpush1.msra.mxu0 %v805
        %956 = vmatprep.subr.mxu0 0.0
        %957 = vmatpush1.msra.mxu0 %v806
        %958 = vmatprep.subr.mxu0 0.0
        %959 = vmatpush1.msra.mxu0 %v807
        %960 = vmatprep.subr.mxu0 0.0
        %961 = vmatpush1.msra.mxu0 0.0
        %962 = vmatprep.subr.mxu0 0.0
        %963 = vmatpush1.msra.mxu0 0.0
        %964 = vmatprep.subr.mxu0 0.0
        %965 = vmatpush1.msra.mxu0 0.0
        %966 = vmatprep.subr.mxu0 0.0
        %967 = vmatpush1.msra.mxu0 0.0
        %968 = vmatprep.subr.mxu0 0.0
        %969 = vmatpush1.msra.mxu0 0.0
        %970 = vmatprep.subr.mxu0 0.0
        %971 = vmatpush1.msra.mxu0 0.0
        %972 = vmatprep.subr.mxu0 0.0
        %973 = vmatpush1.msra.mxu0 0.0
        %974 = vmatprep.subr.mxu0 0.0
        %975 = vmatpush1.msra.mxu0 0.0
        %976 = vmatprep.subr.mxu0 0.0
        %977 = vmatpush1.msra.mxu0 0.0
        %978 = vmatprep.subr.mxu0 0.0
        %979 = vmatpush1.msra.mxu0 0.0
        %980 = vmatprep.subr.mxu0 0.0
        %981 = vmatpush1.msra.mxu0 0.0
        %982 = vmatprep.subr.mxu0 0.0
        %983 = vmatpush1.msra.mxu0 0.0
        %984 = vmatprep.subr.mxu0 0.0
        %985 = vmatpush1.msra.mxu0 0.0
        %986 = vmatprep.subr.mxu0 0.0
        %987 = vmatpush1.msra.mxu0 0.0
        %988 = vmatprep.subr.mxu0 0.0
        %989 = vmatpush1.msra.mxu0 0.0
        %990 = vmatprep.subr.mxu0 0.0
        %991 = vmatpush1.msra.mxu0 0.0
        %992 = vmatprep.subr.mxu0 0.0
        %993 = vmatpush1.msra.mxu0 0.0
        %994 = vmatprep.subr.mxu0 0.0
        %995 = vmatpush1.msra.mxu0 0.0
        %996 = vmatprep.subr.mxu0 0.0
        %997 = vmatpush1.msra.mxu0 0.0
        %998 = vmatprep.subr.mxu0 0.0
        %999 = vmatpush1.msra.mxu0 0.0
        %1000 = vmatprep.subr.mxu0 0.0
        %1001 = vmatpush1.msra.mxu0 0.0
        %1002 = vmatprep.subr.mxu0 0.0
        %1003 = vmatpush1.msra.mxu0 0.0
        %1004 = vmatprep.subr.mxu0 0.0
        %1005 = vmatpush1.msra.mxu0 0.0
        %1006 = vmatprep.subr.mxu0 0.0
        %1007 = vmatpush1.msra.mxu0 0.0
        %1008 = vmatprep.mubr.f32.mxu0 0.0
        %1009 = vmatmul.mubr.f32.gmra.mrb[0].mxu0 %v933
        %v1010 = vpop.f32.mrb[0].mxu0
        %v1011 = vadd.f32 %v930, %v1010
        %v1012 = vpop.f32.mrb[0].mxu0
        %1013 = vmatprep.mubr.f32.mxu0 0.0
        %1014 = vmatmul.mubr.f32.gmra.mrb[0].mxu0 %v936
        %v1015 = vpop.f32.mrb[0].mxu0
        %v1016 = vadd.f32 %v930, %v1015
        %v1017 = vpop.f32.mrb[0].mxu0
        %1018 = vmatprep.mubr.f32.mxu0 0.0
        %1019 = vmatmul.mubr.f32.gmra.mrb[0].mxu0 %v939
        %v1020 = vpop.f32.mrb[0].mxu0
        %v1021 = vadd.f32 %v930, %v1020
        %v1022 = vpop.f32.mrb[0].mxu0
        %1023 = vmatprep.mubr.f32.mxu0 0.0
        %1024 = vmatmul.mubr.f32.gmra.mrb[0].mxu0 %v942
        %v1025 = vpop.f32.mrb[0].mxu0
        %v1026 = vadd.f32 %v930, %v1025
        %v1027 = vpop.f32.mrb[0].mxu0
        %1028 = vdwg.mxu0
        %vm1029 = vcmp.gt.f32.partialorder %v1011, 0.0
        %vm1030 = vcmp.gt.f32.partialorder %v1016, 0.0
        %vm1031 = vcmp.gt.f32.partialorder %v1021, 0.0
        %vm1032 = vcmp.gt.f32.partialorder %v1026, 0.0
        %v1033 = vmin.f32 %v1011, 0.0
        %v1034 = vmin.f32 %v1016, 0.0
        %v1035 = vmin.f32 %v1021, 0.0
        %v1036 = vmin.f32 %v1026, 0.0
        %v1037 = vmul.f32 %v1033, 1.442695
        %v1038 = vpow.pop %v1037
        %v1039 = vmul.f32 %v1034, 1.442695
        %v1040 = vpow.pop %v1039
        %v1041 = vmul.f32 %v1035, 1.442695
        %v1042 = vpow.pop %v1041
        %v1043 = vmul.f32 %v1036, 1.442695
        %v1044 = vpow.pop %v1043
        %v1045 = vsub.f32 %v1038, 1.0
        %v1046 = vsub.f32 %v1040, 1.0
        %v1047 = vsub.f32 %v1042, 1.0
        %v1048 = vsub.f32 %v1044, 1.0
        %v1049 = vsel %vm1029, %v1011, %v1045
        %v1050 = vsel %vm1030, %v1016, %v1046
        %v1051 = vsel %vm1031, %v1021, %v1047
        %v1052 = vsel %vm1032, %v1026, %v1048
        %vm1053 = vcmask 130048
        %1054 = vst.msk [vmem:[%s391] sm:$0xff] %vm1053, %v1049
        %1055 = vst.msk [vmem:[%s391 + $0x8] sm:$0xff] %vm1053, %v1050
        %1056 = vst.msk [vmem:[%s391 + $0x10] sm:$0xff] %vm1053, %v1051
        %1057 = vst.msk [vmem:[%s391 + $0x18] sm:$0xff] %vm1053, %v1052
        %1058 = vset.pattern.permute.xlu0 1
        %1059 = vperm.xlu0 %1058, %v811
        %v1060 = vpop.permute.xlu0 %1059
        %1062 = vset.pattern.permute.xlu0 1
        %1063 = vperm.xlu0 %1062, %v812
        %v1064 = vpop.permute.xlu0 %1063
        %1066 = vset.pattern.permute.xlu0 1
        %1067 = vperm.xlu0 %1066, %v813
        %v1068 = vpop.permute.xlu0 %1067
        %1070 = vset.pattern.permute.xlu0 1
        %1071 = vperm.xlu0 %1070, %v814
        %v1072 = vpop.permute.xlu0 %1071
        %v1074 = vlaneseq
        %v1075 = vshrl.u32 %v1074, 7
        %v1076 = vsub.s32 1, %v1075
        %v1077 = vrot.slane %v808, %v1076
        %v1078 = vadd.f32 %v1060, %v1077
        %v1079 = vadd.f32 %v1064, %v1077
        %v1080 = vadd.f32 %v1068, %v1077
        %v1081 = vadd.f32 %v1072, %v1077
        %vm1082 = vcmp.gt.f32.partialorder %v1078, 0.0
        %vm1083 = vcmp.gt.f32.partialorder %v1079, 0.0
        %vm1084 = vcmp.gt.f32.partialorder %v1080, 0.0
        %vm1085 = vcmp.gt.f32.partialorder %v1081, 0.0
        %v1086 = vmul.f32 %v1078, 0.2
        %v1087 = vmul.f32 %v1079, 0.2
        %v1088 = vmul.f32 %v1080, 0.2
        %v1089 = vmul.f32 %v1081, 0.2
        %v1090 = vsel %vm1082, %v1078, %v1086
        %v1091 = vsel %vm1083, %v1079, %v1087
        %v1092 = vsel %vm1084, %v1080, %v1088
        %v1093 = vsel %vm1085, %v1081, %v1089
        %v1094 = vadd.f32 %v1090, %v828
        %v1095 = vadd.f32 %v1091, %v829
        %v1096 = vadd.f32 %v1092, %v830
        %v1097 = vadd.f32 %v1093, %v831
        %v1098 = vsel %vm877, %v1094, -inf
        %1099 = vmax.xlane.f32.xlu0 %v1098
        %v1100 = vpop.xlane.xlu0 %1099
        %v1101 = vsel %vm877, %v1095, -inf
        %1102 = vmax.xlane.f32.xlu0 %v1101
        %v1103 = vpop.xlane.xlu0 %1102
        %v1104 = vsel %vm877, %v1096, -inf
        %1105 = vmax.xlane.f32.xlu0 %v1104
        %v1106 = vpop.xlane.xlu0 %1105
        %v1107 = vsel %vm877, %v1097, -inf
        %1108 = vmax.xlane.f32.xlu0 %v1107
        %v1109 = vpop.xlane.xlu0 %1108
        %v1110 = vsub.f32 %v1094, %v1100
        %v1111 = vsub.f32 %v1095, %v1103
        %v1112 = vsub.f32 %v1096, %v1106
        %v1113 = vsub.f32 %v1097, %v1109
        %v1114 = vmul.f32 %v1110, 1.442695
        %v1115 = vpow.pop %v1114
        %v1116 = vmul.f32 %v1111, 1.442695
        %v1117 = vpow.pop %v1116
        %v1118 = vmul.f32 %v1112, 1.442695
        %v1119 = vpow.pop %v1118
        %v1120 = vmul.f32 %v1113, 1.442695
        %v1121 = vpow.pop %v1120
        %v1122 = vsel %vm877, %v1115, 0.0
        %1123 = vadd.xlane.f32.xlu0 %v1122
        %v1124 = vpop.xlane.xlu0 %1123
        %v1125 = vsel %vm877, %v1117, 0.0
        %1126 = vadd.xlane.f32.xlu0 %v1125
        %v1127 = vpop.xlane.xlu0 %1126
        %v1128 = vsel %vm877, %v1119, 0.0
        %1129 = vadd.xlane.f32.xlu0 %v1128
        %v1130 = vpop.xlane.xlu0 %1129
        %v1131 = vsel %vm877, %v1121, 0.0
        %1132 = vadd.xlane.f32.xlu0 %v1131
        %v1133 = vpop.xlane.xlu0 %1132
        %v1134 = vmax.f32 %v1124, 1e-30
        %v1135 = vmax.f32 %v1127, 1e-30
        %v1136 = vmax.f32 %v1130, 1e-30
        %v1137 = vmax.f32 %v1133, 1e-30
        %v1138 = vrcp.pop %v1134
        %v1139 = vrcp.pop %v1135
        %v1140 = vrcp.pop %v1136
        %v1141 = vrcp.pop %v1137
        %v1142 = vmul.f32 %v1115, %v1138
        %v1143 = vmul.f32 %v1117, %v1139
        %v1144 = vmul.f32 %v1119, %v1140
        %v1145 = vmul.f32 %v1121, %v1141
        %1154 = vrot.lane.b32.xlu0 %v800, 112
        %v1155 = vpop.permute.xlu0 %1154
        %1156 = vrot.lane.b32.xlu0 %v801, 112
        %v1157 = vpop.permute.xlu0 %1156
        %1158 = vrot.lane.b32.xlu0 %v802, 112
        %v1159 = vpop.permute.xlu0 %1158
        %1160 = vrot.lane.b32.xlu0 %v803, 112
        %v1161 = vpop.permute.xlu0 %1160
        %1162 = vrot.lane.b32.xlu0 %v804, 112
        %v1163 = vpop.permute.xlu0 %1162
        %1164 = vrot.lane.b32.xlu0 %v805, 112
        %v1165 = vpop.permute.xlu0 %1164
        %1166 = vrot.lane.b32.xlu0 %v806, 112
        %v1167 = vpop.permute.xlu0 %1166
        %1168 = vrot.lane.b32.xlu0 %v807, 112
        %v1169 = vpop.permute.xlu0 %1168
        %1178 = vrot.lane.b32.xlu0 %v930, 112
        %v1179 = vpop.permute.xlu0 %1178
        %v1182 = vsel %vm877, %v1142, 0
        %v1185 = vsel %vm877, %v1143, 0
        %v1188 = vsel %vm877, %v1144, 0
        %v1191 = vsel %vm877, %v1145, 0
        %1193 = vmatprep.subr.mxu0 0.0
        %1194 = vmatpush1.msra.mxu0 %v1155
        %1195 = vmatprep.subr.mxu0 0.0
        %1196 = vmatpush1.msra.mxu0 %v1157
        %1197 = vmatprep.subr.mxu0 0.0
        %1198 = vmatpush1.msra.mxu0 %v1159
        %1199 = vmatprep.subr.mxu0 0.0
        %1200 = vmatpush1.msra.mxu0 %v1161
        %1201 = vmatprep.subr.mxu0 0.0
        %1202 = vmatpush1.msra.mxu0 %v1163
        %1203 = vmatprep.subr.mxu0 0.0
        %1204 = vmatpush1.msra.mxu0 %v1165
        %1205 = vmatprep.subr.mxu0 0.0
        %1206 = vmatpush1.msra.mxu0 %v1167
        %1207 = vmatprep.subr.mxu0 0.0
        %1208 = vmatpush1.msra.mxu0 %v1169
        %1209 = vmatprep.subr.mxu0 0.0
        %1210 = vmatpush1.msra.mxu0 0.0
        %1211 = vmatprep.subr.mxu0 0.0
        %1212 = vmatpush1.msra.mxu0 0.0
        %1213 = vmatprep.subr.mxu0 0.0
        %1214 = vmatpush1.msra.mxu0 0.0
        %1215 = vmatprep.subr.mxu0 0.0
        %1216 = vmatpush1.msra.mxu0 0.0
        %1217 = vmatprep.subr.mxu0 0.0
        %1218 = vmatpush1.msra.mxu0 0.0
        %1219 = vmatprep.subr.mxu0 0.0
        %1220 = vmatpush1.msra.mxu0 0.0
        %1221 = vmatprep.subr.mxu0 0.0
        %1222 = vmatpush1.msra.mxu0 0.0
        %1223 = vmatprep.subr.mxu0 0.0
        %1224 = vmatpush1.msra.mxu0 0.0
        %1225 = vmatprep.subr.mxu0 0.0
        %1226 = vmatpush1.msra.mxu0 0.0
        %1227 = vmatprep.subr.mxu0 0.0
        %1228 = vmatpush1.msra.mxu0 0.0
        %1229 = vmatprep.subr.mxu0 0.0
        %1230 = vmatpush1.msra.mxu0 0.0
        %1231 = vmatprep.subr.mxu0 0.0
        %1232 = vmatpush1.msra.mxu0 0.0
        %1233 = vmatprep.subr.mxu0 0.0
        %1234 = vmatpush1.msra.mxu0 0.0
        %1235 = vmatprep.subr.mxu0 0.0
        %1236 = vmatpush1.msra.mxu0 0.0
        %1237 = vmatprep.subr.mxu0 0.0
        %1238 = vmatpush1.msra.mxu0 0.0
        %1239 = vmatprep.subr.mxu0 0.0
        %1240 = vmatpush1.msra.mxu0 0.0
        %1241 = vmatprep.subr.mxu0 0.0
        %1242 = vmatpush1.msra.mxu0 0.0
        %1243 = vmatprep.subr.mxu0 0.0
        %1244 = vmatpush1.msra.mxu0 0.0
        %1245 = vmatprep.subr.mxu0 0.0
        %1246 = vmatpush1.msra.mxu0 0.0
        %1247 = vmatprep.subr.mxu0 0.0
        %1248 = vmatpush1.msra.mxu0 0.0
        %1249 = vmatprep.subr.mxu0 0.0
        %1250 = vmatpush1.msra.mxu0 0.0
        %1251 = vmatprep.subr.mxu0 0.0
        %1252 = vmatpush1.msra.mxu0 0.0
        %1253 = vmatprep.subr.mxu0 0.0
        %1254 = vmatpush1.msra.mxu0 0.0
        %1255 = vmatprep.subr.mxu0 0.0
        %1256 = vmatpush1.msra.mxu0 0.0
        %1257 = vmatprep.mubr.f32.mxu0 0.0
        %1258 = vmatmul.mubr.f32.gmra.mrb[0].mxu0 %v1182
        %v1259 = vpop.f32.mrb[0].mxu0
        %v1260 = vadd.f32 %v1179, %v1259
        %v1261 = vpop.f32.mrb[0].mxu0
        %1262 = vmatprep.mubr.f32.mxu0 0.0
        %1263 = vmatmul.mubr.f32.gmra.mrb[0].mxu0 %v1185
        %v1264 = vpop.f32.mrb[0].mxu0
        %v1265 = vadd.f32 %v1179, %v1264
        %v1266 = vpop.f32.mrb[0].mxu0
        %1267 = vmatprep.mubr.f32.mxu0 0.0
        %1268 = vmatmul.mubr.f32.gmra.mrb[0].mxu0 %v1188
        %v1269 = vpop.f32.mrb[0].mxu0
        %v1270 = vadd.f32 %v1179, %v1269
        %v1271 = vpop.f32.mrb[0].mxu0
        %1272 = vmatprep.mubr.f32.mxu0 0.0
        %1273 = vmatmul.mubr.f32.gmra.mrb[0].mxu0 %v1191
        %v1274 = vpop.f32.mrb[0].mxu0
        %v1275 = vadd.f32 %v1179, %v1274
        %v1276 = vpop.f32.mrb[0].mxu0
        %1277 = vdwg.mxu0
        %vm1278 = vcmp.gt.f32.partialorder %v1260, 0.0
        %vm1279 = vcmp.gt.f32.partialorder %v1265, 0.0
        %vm1280 = vcmp.gt.f32.partialorder %v1270, 0.0
        %vm1281 = vcmp.gt.f32.partialorder %v1275, 0.0
        %v1282 = vmin.f32 %v1260, 0.0
        %v1283 = vmin.f32 %v1265, 0.0
        %v1284 = vmin.f32 %v1270, 0.0
        %v1285 = vmin.f32 %v1275, 0.0
        %v1286 = vmul.f32 %v1282, 1.442695
        %v1287 = vpow.pop %v1286
        %v1288 = vmul.f32 %v1283, 1.442695
        %v1289 = vpow.pop %v1288
        %v1290 = vmul.f32 %v1284, 1.442695
        %v1291 = vpow.pop %v1290
        %v1292 = vmul.f32 %v1285, 1.442695
        %v1293 = vpow.pop %v1292
        %v1294 = vsub.f32 %v1287, 1.0
        %v1295 = vsub.f32 %v1289, 1.0
        %v1296 = vsub.f32 %v1291, 1.0
        %v1297 = vsub.f32 %v1293, 1.0
        %v1298 = vsel %vm1278, %v1260, %v1294
        %v1299 = vsel %vm1279, %v1265, %v1295
        %v1300 = vsel %vm1280, %v1270, %v1296
        %v1301 = vsel %vm1281, %v1275, %v1297
        %1306 = vrot.lane.b32.xlu0 %v1298, 16
        %v1307 = vpop.permute.xlu0 %1306
        %1308 = vrot.lane.b32.xlu0 %v1299, 16
        %v1309 = vpop.permute.xlu0 %1308
        %1310 = vrot.lane.b32.xlu0 %v1300, 16
        %v1311 = vpop.permute.xlu0 %1310
        %1312 = vrot.lane.b32.xlu0 %v1301, 16
        %v1313 = vpop.permute.xlu0 %1312
        %vm1318 = vcmask 261248
        %1319 = vst.msk [vmem:[%s391] sm:$0xff] %vm1318, %v1307
        %1320 = vst.msk [vmem:[%s391 + $0x8] sm:$0xff] %vm1318, %v1309
        %1321 = vst.msk [vmem:[%s391 + $0x10] sm:$0xff] %vm1318, %v1311
        %1322 = vst.msk [vmem:[%s391 + $0x18] sm:$0xff] %vm1318, %v1313
        %1323 = vset.pattern.permute.xlu0 2
        %1324 = vperm.xlu0 %1323, %v811
        %v1325 = vpop.permute.xlu0 %1324
        %1327 = vset.pattern.permute.xlu0 2
        %1328 = vperm.xlu0 %1327, %v812
        %v1329 = vpop.permute.xlu0 %1328
        %1331 = vset.pattern.permute.xlu0 2
        %1332 = vperm.xlu0 %1331, %v813
        %v1333 = vpop.permute.xlu0 %1332
        %1335 = vset.pattern.permute.xlu0 2
        %1336 = vperm.xlu0 %1335, %v814
        %v1337 = vpop.permute.xlu0 %1336
        %v1339 = vlaneseq
        %v1340 = vshrl.u32 %v1339, 7
        %v1341 = vsub.s32 2, %v1340
        %v1342 = vrot.slane %v808, %v1341
        %v1343 = vadd.f32 %v1325, %v1342
        %v1344 = vadd.f32 %v1329, %v1342
        %v1345 = vadd.f32 %v1333, %v1342
        %v1346 = vadd.f32 %v1337, %v1342
        %vm1347 = vcmp.gt.f32.partialorder %v1343, 0.0
        %vm1348 = vcmp.gt.f32.partialorder %v1344, 0.0
        %vm1349 = vcmp.gt.f32.partialorder %v1345, 0.0
        %vm1350 = vcmp.gt.f32.partialorder %v1346, 0.0
        %v1351 = vmul.f32 %v1343, 0.2
        %v1352 = vmul.f32 %v1344, 0.2
        %v1353 = vmul.f32 %v1345, 0.2
        %v1354 = vmul.f32 %v1346, 0.2
        %v1355 = vsel %vm1347, %v1343, %v1351
        %v1356 = vsel %vm1348, %v1344, %v1352
        %v1357 = vsel %vm1349, %v1345, %v1353
        %v1358 = vsel %vm1350, %v1346, %v1354
        %v1359 = vadd.f32 %v1355, %v828
        %v1360 = vadd.f32 %v1356, %v829
        %v1361 = vadd.f32 %v1357, %v830
        %v1362 = vadd.f32 %v1358, %v831
        %v1363 = vsel %vm877, %v1359, -inf
        %1364 = vmax.xlane.f32.xlu0 %v1363
        %v1365 = vpop.xlane.xlu0 %1364
        %v1366 = vsel %vm877, %v1360, -inf
        %1367 = vmax.xlane.f32.xlu0 %v1366
        %v1368 = vpop.xlane.xlu0 %1367
        %v1369 = vsel %vm877, %v1361, -inf
        %1370 = vmax.xlane.f32.xlu0 %v1369
        %v1371 = vpop.xlane.xlu0 %1370
        %v1372 = vsel %vm877, %v1362, -inf
        %1373 = vmax.xlane.f32.xlu0 %v1372
        %v1374 = vpop.xlane.xlu0 %1373
        %v1375 = vsub.f32 %v1359, %v1365
        %v1376 = vsub.f32 %v1360, %v1368
        %v1377 = vsub.f32 %v1361, %v1371
        %v1378 = vsub.f32 %v1362, %v1374
        %v1379 = vmul.f32 %v1375, 1.442695
        %v1380 = vpow.pop %v1379
        %v1381 = vmul.f32 %v1376, 1.442695
        %v1382 = vpow.pop %v1381
        %v1383 = vmul.f32 %v1377, 1.442695
        %v1384 = vpow.pop %v1383
        %v1385 = vmul.f32 %v1378, 1.442695
        %v1386 = vpow.pop %v1385
        %v1387 = vsel %vm877, %v1380, 0.0
        %1388 = vadd.xlane.f32.xlu0 %v1387
        %v1389 = vpop.xlane.xlu0 %1388
        %v1390 = vsel %vm877, %v1382, 0.0
        %1391 = vadd.xlane.f32.xlu0 %v1390
        %v1392 = vpop.xlane.xlu0 %1391
        %v1393 = vsel %vm877, %v1384, 0.0
        %1394 = vadd.xlane.f32.xlu0 %v1393
        %v1395 = vpop.xlane.xlu0 %1394
        %v1396 = vsel %vm877, %v1386, 0.0
        %1397 = vadd.xlane.f32.xlu0 %v1396
        %v1398 = vpop.xlane.xlu0 %1397
        %v1399 = vmax.f32 %v1389, 1e-30
        %v1400 = vmax.f32 %v1392, 1e-30
        %v1401 = vmax.f32 %v1395, 1e-30
        %v1402 = vmax.f32 %v1398, 1e-30
        %v1403 = vrcp.pop %v1399
        %v1404 = vrcp.pop %v1400
        %v1405 = vrcp.pop %v1401
        %v1406 = vrcp.pop %v1402
        %v1407 = vmul.f32 %v1380, %v1403
        %v1408 = vmul.f32 %v1382, %v1404
        %v1409 = vmul.f32 %v1384, %v1405
        %v1410 = vmul.f32 %v1386, %v1406
        %1411 = vrot.lane.b32.xlu0 %v800, 96
        %v1412 = vpop.permute.xlu0 %1411
        %1413 = vrot.lane.b32.xlu0 %v801, 96
        %v1414 = vpop.permute.xlu0 %1413
        %1415 = vrot.lane.b32.xlu0 %v802, 96
        %v1416 = vpop.permute.xlu0 %1415
        %1417 = vrot.lane.b32.xlu0 %v803, 96
        %v1418 = vpop.permute.xlu0 %1417
        %1419 = vrot.lane.b32.xlu0 %v804, 96
        %v1420 = vpop.permute.xlu0 %1419
        %1421 = vrot.lane.b32.xlu0 %v805, 96
        %v1422 = vpop.permute.xlu0 %1421
        %1423 = vrot.lane.b32.xlu0 %v806, 96
        %v1424 = vpop.permute.xlu0 %1423
        %1425 = vrot.lane.b32.xlu0 %v807, 96
        %v1426 = vpop.permute.xlu0 %1425
        %1435 = vrot.lane.b32.xlu0 %v930, 96
        %v1436 = vpop.permute.xlu0 %1435
        %v1439 = vsel %vm877, %v1407, 0
        %v1442 = vsel %vm877, %v1408, 0
        %v1445 = vsel %vm877, %v1409, 0
        %v1448 = vsel %vm877, %v1410, 0
        %1450 = vmatprep.subr.mxu0 0.0
        %1451 = vmatpush1.msra.mxu0 %v1412
        %1452 = vmatprep.subr.mxu0 0.0
        %1453 = vmatpush1.msra.mxu0 %v1414
        %1454 = vmatprep.subr.mxu0 0.0
        %1455 = vmatpush1.msra.mxu0 %v1416
        %1456 = vmatprep.subr.mxu0 0.0
        %1457 = vmatpush1.msra.mxu0 %v1418
        %1458 = vmatprep.subr.mxu0 0.0
        %1459 = vmatpush1.msra.mxu0 %v1420
        %1460 = vmatprep.subr.mxu0 0.0
        %1461 = vmatpush1.msra.mxu0 %v1422
        %1462 = vmatprep.subr.mxu0 0.0
        %1463 = vmatpush1.msra.mxu0 %v1424
        %1464 = vmatprep.subr.mxu0 0.0
        %1465 = vmatpush1.msra.mxu0 %v1426
        %1466 = vmatprep.subr.mxu0 0.0
        %1467 = vmatpush1.msra.mxu0 0.0
        %1468 = vmatprep.subr.mxu0 0.0
        %1469 = vmatpush1.msra.mxu0 0.0
        %1470 = vmatprep.subr.mxu0 0.0
        %1471 = vmatpush1.msra.mxu0 0.0
        %1472 = vmatprep.subr.mxu0 0.0
        %1473 = vmatpush1.msra.mxu0 0.0
        %1474 = vmatprep.subr.mxu0 0.0
        %1475 = vmatpush1.msra.mxu0 0.0
        %1476 = vmatprep.subr.mxu0 0.0
        %1477 = vmatpush1.msra.mxu0 0.0
        %1478 = vmatprep.subr.mxu0 0.0
        %1479 = vmatpush1.msra.mxu0 0.0
        %1480 = vmatprep.subr.mxu0 0.0
        %1481 = vmatpush1.msra.mxu0 0.0
        %1482 = vmatprep.subr.mxu0 0.0
        %1483 = vmatpush1.msra.mxu0 0.0
        %1484 = vmatprep.subr.mxu0 0.0
        %1485 = vmatpush1.msra.mxu0 0.0
        %1486 = vmatprep.subr.mxu0 0.0
        %1487 = vmatpush1.msra.mxu0 0.0
        %1488 = vmatprep.subr.mxu0 0.0
        %1489 = vmatpush1.msra.mxu0 0.0
        %1490 = vmatprep.subr.mxu0 0.0
        %1491 = vmatpush1.msra.mxu0 0.0
        %1492 = vmatprep.subr.mxu0 0.0
        %1493 = vmatpush1.msra.mxu0 0.0
        %1494 = vmatprep.subr.mxu0 0.0
        %1495 = vmatpush1.msra.mxu0 0.0
        %1496 = vmatprep.subr.mxu0 0.0
        %1497 = vmatpush1.msra.mxu0 0.0
        %1498 = vmatprep.subr.mxu0 0.0
        %1499 = vmatpush1.msra.mxu0 0.0
        %1500 = vmatprep.subr.mxu0 0.0
        %1501 = vmatpush1.msra.mxu0 0.0
        %1502 = vmatprep.subr.mxu0 0.0
        %1503 = vmatpush1.msra.mxu0 0.0
        %1504 = vmatprep.subr.mxu0 0.0
        %1505 = vmatpush1.msra.mxu0 0.0
        %1506 = vmatprep.subr.mxu0 0.0
        %1507 = vmatpush1.msra.mxu0 0.0
        %1508 = vmatprep.subr.mxu0 0.0
        %1509 = vmatpush1.msra.mxu0 0.0
        %1510 = vmatprep.subr.mxu0 0.0
        %1511 = vmatpush1.msra.mxu0 0.0
        %1512 = vmatprep.subr.mxu0 0.0
        %1513 = vmatpush1.msra.mxu0 0.0
        %1514 = vmatprep.mubr.f32.mxu0 0.0
        %1515 = vmatmul.mubr.f32.gmra.mrb[0].mxu0 %v1439
        %v1516 = vpop.f32.mrb[0].mxu0
        %v1517 = vadd.f32 %v1436, %v1516
        %v1518 = vpop.f32.mrb[0].mxu0
        %1519 = vmatprep.mubr.f32.mxu0 0.0
        %1520 = vmatmul.mubr.f32.gmra.mrb[0].mxu0 %v1442
        %v1521 = vpop.f32.mrb[0].mxu0
        %v1522 = vadd.f32 %v1436, %v1521
        %v1523 = vpop.f32.mrb[0].mxu0
        %1524 = vmatprep.mubr.f32.mxu0 0.0
        %1525 = vmatmul.mubr.f32.gmra.mrb[0].mxu0 %v1445
        %v1526 = vpop.f32.mrb[0].mxu0
        %v1527 = vadd.f32 %v1436, %v1526
        %v1528 = vpop.f32.mrb[0].mxu0
        %1529 = vmatprep.mubr.f32.mxu0 0.0
        %1530 = vmatmul.mubr.f32.gmra.mrb[0].mxu0 %v1448
        %v1531 = vpop.f32.mrb[0].mxu0
        %v1532 = vadd.f32 %v1436, %v1531
        %v1533 = vpop.f32.mrb[0].mxu0
        %1534 = vdwg.mxu0
        %vm1535 = vcmp.gt.f32.partialorder %v1517, 0.0
        %vm1536 = vcmp.gt.f32.partialorder %v1522, 0.0
        %vm1537 = vcmp.gt.f32.partialorder %v1527, 0.0
        %vm1538 = vcmp.gt.f32.partialorder %v1532, 0.0
        %v1539 = vmin.f32 %v1517, 0.0
        %v1540 = vmin.f32 %v1522, 0.0
        %v1541 = vmin.f32 %v1527, 0.0
        %v1542 = vmin.f32 %v1532, 0.0
        %v1543 = vmul.f32 %v1539, 1.442695
        %v1544 = vpow.pop %v1543
        %v1545 = vmul.f32 %v1540, 1.442695
        %v1546 = vpow.pop %v1545
        %v1547 = vmul.f32 %v1541, 1.442695
        %v1548 = vpow.pop %v1547
        %v1549 = vmul.f32 %v1542, 1.442695
        %v1550 = vpow.pop %v1549
        %v1551 = vsub.f32 %v1544, 1.0
        %v1552 = vsub.f32 %v1546, 1.0
        %v1553 = vsub.f32 %v1548, 1.0
        %v1554 = vsub.f32 %v1550, 1.0
        %v1555 = vsel %vm1535, %v1517, %v1551
        %v1556 = vsel %vm1536, %v1522, %v1552
        %v1557 = vsel %vm1537, %v1527, %v1553
        %v1558 = vsel %vm1538, %v1532, %v1554
        %1563 = vrot.lane.b32.xlu0 %v1555, 32
        %v1564 = vpop.permute.xlu0 %1563
        %1565 = vrot.lane.b32.xlu0 %v1556, 32
        %v1566 = vpop.permute.xlu0 %1565
        %1567 = vrot.lane.b32.xlu0 %v1557, 32
        %v1568 = vpop.permute.xlu0 %1567
        %1569 = vrot.lane.b32.xlu0 %v1558, 32
        %v1570 = vpop.permute.xlu0 %1569
        %vm1575 = vcmask 392448
        %1576 = vst.msk [vmem:[%s391] sm:$0xff] %vm1575, %v1564
        %1577 = vst.msk [vmem:[%s391 + $0x8] sm:$0xff] %vm1575, %v1566
        %1578 = vst.msk [vmem:[%s391 + $0x10] sm:$0xff] %vm1575, %v1568
        %1579 = vst.msk [vmem:[%s391 + $0x18] sm:$0xff] %vm1575, %v1570
        %1580 = vset.pattern.permute.xlu0 3
        %1581 = vperm.xlu0 %1580, %v811
        %v1582 = vpop.permute.xlu0 %1581
        %1584 = vset.pattern.permute.xlu0 3
        %1585 = vperm.xlu0 %1584, %v812
        %v1586 = vpop.permute.xlu0 %1585
        %1588 = vset.pattern.permute.xlu0 3
        %1589 = vperm.xlu0 %1588, %v813
        %v1590 = vpop.permute.xlu0 %1589
        %1592 = vset.pattern.permute.xlu0 3
        %1593 = vperm.xlu0 %1592, %v814
        %v1594 = vpop.permute.xlu0 %1593
        %v1596 = vlaneseq
        %v1597 = vshrl.u32 %v1596, 7
        %v1598 = vsub.s32 3, %v1597
        %v1599 = vrot.slane %v808, %v1598
        %v1600 = vadd.f32 %v1582, %v1599
        %v1601 = vadd.f32 %v1586, %v1599
        %v1602 = vadd.f32 %v1590, %v1599
        %v1603 = vadd.f32 %v1594, %v1599
        %vm1604 = vcmp.gt.f32.partialorder %v1600, 0.0
        %vm1605 = vcmp.gt.f32.partialorder %v1601, 0.0
        %vm1606 = vcmp.gt.f32.partialorder %v1602, 0.0
        %vm1607 = vcmp.gt.f32.partialorder %v1603, 0.0
        %v1608 = vmul.f32 %v1600, 0.2
        %v1609 = vmul.f32 %v1601, 0.2
        %v1610 = vmul.f32 %v1602, 0.2
        %v1611 = vmul.f32 %v1603, 0.2
        %v1612 = vsel %vm1604, %v1600, %v1608
        %v1613 = vsel %vm1605, %v1601, %v1609
        %v1614 = vsel %vm1606, %v1602, %v1610
        %v1615 = vsel %vm1607, %v1603, %v1611
        %v1616 = vadd.f32 %v1612, %v828
        %v1617 = vadd.f32 %v1613, %v829
        %v1618 = vadd.f32 %v1614, %v830
        %v1619 = vadd.f32 %v1615, %v831
        %v1620 = vsel %vm877, %v1616, -inf
        %1621 = vmax.xlane.f32.xlu0 %v1620
        %v1622 = vpop.xlane.xlu0 %1621
        %v1623 = vsel %vm877, %v1617, -inf
        %1624 = vmax.xlane.f32.xlu0 %v1623
        %v1625 = vpop.xlane.xlu0 %1624
        %v1626 = vsel %vm877, %v1618, -inf
        %1627 = vmax.xlane.f32.xlu0 %v1626
        %v1628 = vpop.xlane.xlu0 %1627
        %v1629 = vsel %vm877, %v1619, -inf
        %1630 = vmax.xlane.f32.xlu0 %v1629
        %v1631 = vpop.xlane.xlu0 %1630
        %v1632 = vsub.f32 %v1616, %v1622
        %v1633 = vsub.f32 %v1617, %v1625
        %v1634 = vsub.f32 %v1618, %v1628
        %v1635 = vsub.f32 %v1619, %v1631
        %v1636 = vmul.f32 %v1632, 1.442695
        %v1637 = vpow.pop %v1636
        %v1638 = vmul.f32 %v1633, 1.442695
        %v1639 = vpow.pop %v1638
        %v1640 = vmul.f32 %v1634, 1.442695
        %v1641 = vpow.pop %v1640
        %v1642 = vmul.f32 %v1635, 1.442695
        %v1643 = vpow.pop %v1642
        %v1644 = vsel %vm877, %v1637, 0.0
        %1645 = vadd.xlane.f32.xlu0 %v1644
        %v1646 = vpop.xlane.xlu0 %1645
        %v1647 = vsel %vm877, %v1639, 0.0
        %1648 = vadd.xlane.f32.xlu0 %v1647
        %v1649 = vpop.xlane.xlu0 %1648
        %v1650 = vsel %vm877, %v1641, 0.0
        %1651 = vadd.xlane.f32.xlu0 %v1650
        %v1652 = vpop.xlane.xlu0 %1651
        %v1653 = vsel %vm877, %v1643, 0.0
        %1654 = vadd.xlane.f32.xlu0 %v1653
        %v1655 = vpop.xlane.xlu0 %1654
        %v1656 = vmax.f32 %v1646, 1e-30
        %v1657 = vmax.f32 %v1649, 1e-30
        %v1658 = vmax.f32 %v1652, 1e-30
        %v1659 = vmax.f32 %v1655, 1e-30
        %v1660 = vrcp.pop %v1656
        %v1661 = vrcp.pop %v1657
        %v1662 = vrcp.pop %v1658
        %v1663 = vrcp.pop %v1659
        %v1664 = vmul.f32 %v1637, %v1660
        %v1665 = vmul.f32 %v1639, %v1661
        %v1666 = vmul.f32 %v1641, %v1662
        %v1667 = vmul.f32 %v1643, %v1663
        %1668 = vrot.lane.b32.xlu0 %v800, 80
        %v1669 = vpop.permute.xlu0 %1668
        %1670 = vrot.lane.b32.xlu0 %v801, 80
        %v1671 = vpop.permute.xlu0 %1670
        %1672 = vrot.lane.b32.xlu0 %v802, 80
        %v1673 = vpop.permute.xlu0 %1672
        %1674 = vrot.lane.b32.xlu0 %v803, 80
        %v1675 = vpop.permute.xlu0 %1674
        %1676 = vrot.lane.b32.xlu0 %v804, 80
        %v1677 = vpop.permute.xlu0 %1676
        %1678 = vrot.lane.b32.xlu0 %v805, 80
        %v1679 = vpop.permute.xlu0 %1678
        %1680 = vrot.lane.b32.xlu0 %v806, 80
        %v1681 = vpop.permute.xlu0 %1680
        %1682 = vrot.lane.b32.xlu0 %v807, 80
        %v1683 = vpop.permute.xlu0 %1682
        %1692 = vrot.lane.b32.xlu0 %v930, 80
        %v1693 = vpop.permute.xlu0 %1692
        %v1696 = vsel %vm877, %v1664, 0
        %v1699 = vsel %vm877, %v1665, 0
        %v1702 = vsel %vm877, %v1666, 0
        %v1705 = vsel %vm877, %v1667, 0
        %1707 = vmatprep.subr.mxu0 0.0
        %1708 = vmatpush1.msra.mxu0 %v1669
        %1709 = vmatprep.subr.mxu0 0.0
        %1710 = vmatpush1.msra.mxu0 %v1671
        %1711 = vmatprep.subr.mxu0 0.0
        %1712 = vmatpush1.msra.mxu0 %v1673
        %1713 = vmatprep.subr.mxu0 0.0
        %1714 = vmatpush1.msra.mxu0 %v1675
        %1715 = vmatprep.subr.mxu0 0.0
        %1716 = vmatpush1.msra.mxu0 %v1677
        %1717 = vmatprep.subr.mxu0 0.0
        %1718 = vmatpush1.msra.mxu0 %v1679
        %1719 = vmatprep.subr.mxu0 0.0
        %1720 = vmatpush1.msra.mxu0 %v1681
        %1721 = vmatprep.subr.mxu0 0.0
        %1722 = vmatpush1.msra.mxu0 %v1683
        %1723 = vmatprep.subr.mxu0 0.0
        %1724 = vmatpush1.msra.mxu0 0.0
        %1725 = vmatprep.subr.mxu0 0.0
        %1726 = vmatpush1.msra.mxu0 0.0
        %1727 = vmatprep.subr.mxu0 0.0
        %1728 = vmatpush1.msra.mxu0 0.0
        %1729 = vmatprep.subr.mxu0 0.0
        %1730 = vmatpush1.msra.mxu0 0.0
        %1731 = vmatprep.subr.mxu0 0.0
        %1732 = vmatpush1.msra.mxu0 0.0
        %1733 = vmatprep.subr.mxu0 0.0
        %1734 = vmatpush1.msra.mxu0 0.0
        %1735 = vmatprep.subr.mxu0 0.0
        %1736 = vmatpush1.msra.mxu0 0.0
        %1737 = vmatprep.subr.mxu0 0.0
        %1738 = vmatpush1.msra.mxu0 0.0
        %1739 = vmatprep.subr.mxu0 0.0
        %1740 = vmatpush1.msra.mxu0 0.0
        %1741 = vmatprep.subr.mxu0 0.0
        %1742 = vmatpush1.msra.mxu0 0.0
        %1743 = vmatprep.subr.mxu0 0.0
        %1744 = vmatpush1.msra.mxu0 0.0
        %1745 = vmatprep.subr.mxu0 0.0
        %1746 = vmatpush1.msra.mxu0 0.0
        %1747 = vmatprep.subr.mxu0 0.0
        %1748 = vmatpush1.msra.mxu0 0.0
        %1749 = vmatprep.subr.mxu0 0.0
        %1750 = vmatpush1.msra.mxu0 0.0
        %1751 = vmatprep.subr.mxu0 0.0
        %1752 = vmatpush1.msra.mxu0 0.0
        %1753 = vmatprep.subr.mxu0 0.0
        %1754 = vmatpush1.msra.mxu0 0.0
        %1755 = vmatprep.subr.mxu0 0.0
        %1756 = vmatpush1.msra.mxu0 0.0
        %1757 = vmatprep.subr.mxu0 0.0
        %1758 = vmatpush1.msra.mxu0 0.0
        %1759 = vmatprep.subr.mxu0 0.0
        %1760 = vmatpush1.msra.mxu0 0.0
        %1761 = vmatprep.subr.mxu0 0.0
        %1762 = vmatpush1.msra.mxu0 0.0
        %1763 = vmatprep.subr.mxu0 0.0
        %1764 = vmatpush1.msra.mxu0 0.0
        %1765 = vmatprep.subr.mxu0 0.0
        %1766 = vmatpush1.msra.mxu0 0.0
        %1767 = vmatprep.subr.mxu0 0.0
        %1768 = vmatpush1.msra.mxu0 0.0
        %1769 = vmatprep.subr.mxu0 0.0
        %1770 = vmatpush1.msra.mxu0 0.0
        %1771 = vmatprep.mubr.f32.mxu0 0.0
        %1772 = vmatmul.mubr.f32.gmra.mrb[0].mxu0 %v1696
        %v1773 = vpop.f32.mrb[0].mxu0
        %v1774 = vadd.f32 %v1693, %v1773
        %v1775 = vpop.f32.mrb[0].mxu0
        %1776 = vmatprep.mubr.f32.mxu0 0.0
        %1777 = vmatmul.mubr.f32.gmra.mrb[0].mxu0 %v1699
        %v1778 = vpop.f32.mrb[0].mxu0
        %v1779 = vadd.f32 %v1693, %v1778
        %v1780 = vpop.f32.mrb[0].mxu0
        %1781 = vmatprep.mubr.f32.mxu0 0.0
        %1782 = vmatmul.mubr.f32.gmra.mrb[0].mxu0 %v1702
        %v1783 = vpop.f32.mrb[0].mxu0
        %v1784 = vadd.f32 %v1693, %v1783
        %v1785 = vpop.f32.mrb[0].mxu0
        %1786 = vmatprep.mubr.f32.mxu0 0.0
        %1787 = vmatmul.mubr.f32.gmra.mrb[0].mxu0 %v1705
        %v1788 = vpop.f32.mrb[0].mxu0
        %v1789 = vadd.f32 %v1693, %v1788
        %v1790 = vpop.f32.mrb[0].mxu0
        %1791 = vdwg.mxu0
        %vm1792 = vcmp.gt.f32.partialorder %v1774, 0.0
        %vm1793 = vcmp.gt.f32.partialorder %v1779, 0.0
        %vm1794 = vcmp.gt.f32.partialorder %v1784, 0.0
        %vm1795 = vcmp.gt.f32.partialorder %v1789, 0.0
        %v1796 = vmin.f32 %v1774, 0.0
        %v1797 = vmin.f32 %v1779, 0.0
        %v1798 = vmin.f32 %v1784, 0.0
        %v1799 = vmin.f32 %v1789, 0.0
        %v1800 = vmul.f32 %v1796, 1.442695
        %v1801 = vpow.pop %v1800
        %v1802 = vmul.f32 %v1797, 1.442695
        %v1803 = vpow.pop %v1802
        %v1804 = vmul.f32 %v1798, 1.442695
        %v1805 = vpow.pop %v1804
        %v1806 = vmul.f32 %v1799, 1.442695
        %v1807 = vpow.pop %v1806
        %v1808 = vsub.f32 %v1801, 1.0
        %v1809 = vsub.f32 %v1803, 1.0
        %v1810 = vsub.f32 %v1805, 1.0
        %v1811 = vsub.f32 %v1807, 1.0
        %v1812 = vsel %vm1792, %v1774, %v1808
        %v1813 = vsel %vm1793, %v1779, %v1809
        %v1814 = vsel %vm1794, %v1784, %v1810
        %v1815 = vsel %vm1795, %v1789, %v1811
        %1820 = vrot.lane.b32.xlu0 %v1812, 48
        %v1821 = vpop.permute.xlu0 %1820
        %1822 = vrot.lane.b32.xlu0 %v1813, 48
        %v1823 = vpop.permute.xlu0 %1822
        %1824 = vrot.lane.b32.xlu0 %v1814, 48
        %v1825 = vpop.permute.xlu0 %1824
        %1826 = vrot.lane.b32.xlu0 %v1815, 48
        %v1827 = vpop.permute.xlu0 %1826
        %vm1832 = vcmask 523648
        %1833 = vst.msk [vmem:[%s391] sm:$0xff] %vm1832, %v1821
        %1834 = vst.msk [vmem:[%s391 + $0x8] sm:$0xff] %vm1832, %v1823
        %1835 = vst.msk [vmem:[%s391 + $0x10] sm:$0xff] %vm1832, %v1825
        %1836 = vst.msk [vmem:[%s391 + $0x18] sm:$0xff] %vm1832, %v1827
        %v1837 = vld [vmem:[%s391] sm:$0xff]
        %v1838 = vld [vmem:[%s391 + $0x8] sm:$0xff]
        %v1839 = vld [vmem:[%s391 + $0x10] sm:$0xff]
        %v1840 = vld [vmem:[%s391 + $0x18] sm:$0xff]
        %v1841 = vld [vmem:[%s5] sm:$0xff]
        %v1842 = vld [vmem:[%s5 + $0x8] sm:$0xff]
        %v1843 = vld [vmem:[%s5 + $0x10] sm:$0xff]
        %v1844 = vld [vmem:[%s5 + $0x18] sm:$0xff]
        %v1845 = vld [vmem:[%s5 + $0x20] sm:$0xff]
        %v1846 = vld [vmem:[%s5 + $0x28] sm:$0xff]
        %v1847 = vld [vmem:[%s5 + $0x30] sm:$0xff]
        %v1848 = vld [vmem:[%s5 + $0x38] sm:$0xff]
        %v1849 = vld [vmem:[%s6] sm:$0x1]
        %v1851 = vlaneseq
        %v1852 = vshrl.u32 %v1851, 7
        %v1853 = vsub.s32 0, %v1852
        %v1854 = vrot.slane %v1849, %v1853
        %v1857 = vsel %vm877, %v1837, 0
        %v1860 = vsel %vm877, %v1838, 0
        %v1863 = vsel %vm877, %v1839, 0
        %v1866 = vsel %vm877, %v1840, 0
        %1868 = vmatprep.subr.mxu0 0.0
        %1869 = vmatpush1.msra.mxu0 %v1841
        %1870 = vmatprep.subr.mxu0 0.0
        %1871 = vmatpush1.msra.mxu0 %v1842
        %1872 = vmatprep.subr.mxu0 0.0
        %1873 = vmatpush1.msra.mxu0 %v1843
        %1874 = vmatprep.subr.mxu0 0.0
        %1875 = vmatpush1.msra.mxu0 %v1844
        %1876 = vmatprep.subr.mxu0 0.0
        %1877 = vmatpush1.msra.mxu0 %v1845
        %1878 = vmatprep.subr.mxu0 0.0
        %1879 = vmatpush1.msra.mxu0 %v1846
        %1880 = vmatprep.subr.mxu0 0.0
        %1881 = vmatpush1.msra.mxu0 %v1847
        %1882 = vmatprep.subr.mxu0 0.0
        %1883 = vmatpush1.msra.mxu0 %v1848
        %1884 = vmatprep.subr.mxu0 0.0
        %1885 = vmatpush1.msra.mxu0 0.0
        %1886 = vmatprep.subr.mxu0 0.0
        %1887 = vmatpush1.msra.mxu0 0.0
        %1888 = vmatprep.subr.mxu0 0.0
        %1889 = vmatpush1.msra.mxu0 0.0
        %1890 = vmatprep.subr.mxu0 0.0
        %1891 = vmatpush1.msra.mxu0 0.0
        %1892 = vmatprep.subr.mxu0 0.0
        %1893 = vmatpush1.msra.mxu0 0.0
        %1894 = vmatprep.subr.mxu0 0.0
        %1895 = vmatpush1.msra.mxu0 0.0
        %1896 = vmatprep.subr.mxu0 0.0
        %1897 = vmatpush1.msra.mxu0 0.0
        %1898 = vmatprep.subr.mxu0 0.0
        %1899 = vmatpush1.msra.mxu0 0.0
        %1900 = vmatprep.subr.mxu0 0.0
        %1901 = vmatpush1.msra.mxu0 0.0
        %1902 = vmatprep.subr.mxu0 0.0
        %1903 = vmatpush1.msra.mxu0 0.0
        %1904 = vmatprep.subr.mxu0 0.0
        %1905 = vmatpush1.msra.mxu0 0.0
        %1906 = vmatprep.subr.mxu0 0.0
        %1907 = vmatpush1.msra.mxu0 0.0
        %1908 = vmatprep.subr.mxu0 0.0
        %1909 = vmatpush1.msra.mxu0 0.0
        %1910 = vmatprep.subr.mxu0 0.0
        %1911 = vmatpush1.msra.mxu0 0.0
        %1912 = vmatprep.subr.mxu0 0.0
        %1913 = vmatpush1.msra.mxu0 0.0
        %1914 = vmatprep.subr.mxu0 0.0
        %1915 = vmatpush1.msra.mxu0 0.0
        %1916 = vmatprep.subr.mxu0 0.0
        %1917 = vmatpush1.msra.mxu0 0.0
        %1918 = vmatprep.subr.mxu0 0.0
        %1919 = vmatpush1.msra.mxu0 0.0
        %1920 = vmatprep.subr.mxu0 0.0
        %1921 = vmatpush1.msra.mxu0 0.0
        %1922 = vmatprep.subr.mxu0 0.0
        %1923 = vmatpush1.msra.mxu0 0.0
        %1924 = vmatprep.subr.mxu0 0.0
        %1925 = vmatpush1.msra.mxu0 0.0
        %1926 = vmatprep.subr.mxu0 0.0
        %1927 = vmatpush1.msra.mxu0 0.0
        %1928 = vmatprep.subr.mxu0 0.0
        %1929 = vmatpush1.msra.mxu0 0.0
        %1930 = vmatprep.subr.mxu0 0.0
        %1931 = vmatpush1.msra.mxu0 0.0
        %1932 = vmatprep.mubr.f32.mxu0 0.0
        %1933 = vmatmul.mubr.f32.gmra.mrb[0].mxu0 %v1857
        %v1934 = vpop.f32.mrb[0].mxu0
        %v1935 = vadd.f32 %v1854, %v1934
        %v1936 = vpop.f32.mrb[0].mxu0
        %1937 = vmatprep.mubr.f32.mxu0 0.0
        %1938 = vmatmul.mubr.f32.gmra.mrb[0].mxu0 %v1860
        %v1939 = vpop.f32.mrb[0].mxu0
        %v1940 = vadd.f32 %v1854, %v1939
        %v1941 = vpop.f32.mrb[0].mxu0
        %1942 = vmatprep.mubr.f32.mxu0 0.0
        %1943 = vmatmul.mubr.f32.gmra.mrb[0].mxu0 %v1863
        %v1944 = vpop.f32.mrb[0].mxu0
        %v1945 = vadd.f32 %v1854, %v1944
        %v1946 = vpop.f32.mrb[0].mxu0
        %1947 = vmatprep.mubr.f32.mxu0 0.0
        %1948 = vmatmul.mubr.f32.gmra.mrb[0].mxu0 %v1866
        %v1949 = vpop.f32.mrb[0].mxu0
        %v1950 = vadd.f32 %v1854, %v1949
        %v1951 = vpop.f32.mrb[0].mxu0
        %1952 = vdwg.mxu0
        %v1953 = vtanh.pop %v1935
        %v1954 = vtanh.pop %v1940
        %v1955 = vtanh.pop %v1945
        %v1956 = vtanh.pop %v1950
        %v1957 = vld [vmem:[%s7] sm:$0xff]
        %v1958 = vld [vmem:[%s7 + $0x8] sm:$0xff]
        %v1959 = vld [vmem:[%s7 + $0x10] sm:$0xff]
        %v1960 = vld [vmem:[%s7 + $0x18] sm:$0xff]
        %v1961 = vld [vmem:[%s7 + $0x20] sm:$0xff]
        %v1962 = vld [vmem:[%s7 + $0x28] sm:$0xff]
        %v1963 = vld [vmem:[%s7 + $0x30] sm:$0xff]
        %v1964 = vld [vmem:[%s7 + $0x38] sm:$0xff]
        %v1965 = vld [vmem:[%s7 + $0x40] sm:$0xff]
        %v1966 = vld [vmem:[%s7 + $0x48] sm:$0xff]
        %v1967 = vld [vmem:[%s7 + $0x50] sm:$0xff]
        %v1968 = vld [vmem:[%s7 + $0x58] sm:$0xff]
        %v1969 = vld [vmem:[%s7 + $0x60] sm:$0xff]
        %v1970 = vld [vmem:[%s7 + $0x68] sm:$0xff]
        %v1971 = vld [vmem:[%s7 + $0x70] sm:$0xff]
        %v1972 = vld [vmem:[%s7 + $0x78] sm:$0xff]
        %1973 = vmatprep.subr.mxu0 0.0
        %1974 = vmatpush1.msra.mxu0 %v1957
        %1975 = vmatprep.subr.mxu0 0.0
        %1976 = vmatpush1.msra.mxu0 %v1958
        %1977 = vmatprep.subr.mxu0 0.0
        %1978 = vmatpush1.msra.mxu0 %v1959
        %1979 = vmatprep.subr.mxu0 0.0
        %1980 = vmatpush1.msra.mxu0 %v1960
        %1981 = vmatprep.subr.mxu0 0.0
        %1982 = vmatpush1.msra.mxu0 %v1961
        %1983 = vmatprep.subr.mxu0 0.0
        %1984 = vmatpush1.msra.mxu0 %v1962
        %1985 = vmatprep.subr.mxu0 0.0
        %1986 = vmatpush1.msra.mxu0 %v1963
        %1987 = vmatprep.subr.mxu0 0.0
        %1988 = vmatpush1.msra.mxu0 %v1964
        %1989 = vmatprep.subr.mxu0 0.0
        %1990 = vmatpush1.msra.mxu0 %v1965
        %1991 = vmatprep.subr.mxu0 0.0
        %1992 = vmatpush1.msra.mxu0 %v1966
        %1993 = vmatprep.subr.mxu0 0.0
        %1994 = vmatpush1.msra.mxu0 %v1967
        %1995 = vmatprep.subr.mxu0 0.0
        %1996 = vmatpush1.msra.mxu0 %v1968
        %1997 = vmatprep.subr.mxu0 0.0
        %1998 = vmatpush1.msra.mxu0 %v1969
        %1999 = vmatprep.subr.mxu0 0.0
        %2000 = vmatpush1.msra.mxu0 %v1970
        %2001 = vmatprep.subr.mxu0 0.0
        %2002 = vmatpush1.msra.mxu0 %v1971
        %2003 = vmatprep.subr.mxu0 0.0
        %2004 = vmatpush1.msra.mxu0 %v1972
        %2005 = vmatprep.subr.mxu0 0.0
        %2006 = vmatpush1.msra.mxu0 0.0
        %2007 = vmatprep.subr.mxu0 0.0
        %2008 = vmatpush1.msra.mxu0 0.0
        %2009 = vmatprep.subr.mxu0 0.0
        %2010 = vmatpush1.msra.mxu0 0.0
        %2011 = vmatprep.subr.mxu0 0.0
        %2012 = vmatpush1.msra.mxu0 0.0
        %2013 = vmatprep.subr.mxu0 0.0
        %2014 = vmatpush1.msra.mxu0 0.0
        %2015 = vmatprep.subr.mxu0 0.0
        %2016 = vmatpush1.msra.mxu0 0.0
        %2017 = vmatprep.subr.mxu0 0.0
        %2018 = vmatpush1.msra.mxu0 0.0
        %2019 = vmatprep.subr.mxu0 0.0
        %2020 = vmatpush1.msra.mxu0 0.0
        %2021 = vmatprep.subr.mxu0 0.0
        %2022 = vmatpush1.msra.mxu0 0.0
        %2023 = vmatprep.subr.mxu0 0.0
        %2024 = vmatpush1.msra.mxu0 0.0
        %2025 = vmatprep.subr.mxu0 0.0
        %2026 = vmatpush1.msra.mxu0 0.0
        %2027 = vmatprep.subr.mxu0 0.0
        %2028 = vmatpush1.msra.mxu0 0.0
        %2029 = vmatprep.subr.mxu0 0.0
        %2030 = vmatpush1.msra.mxu0 0.0
        %2031 = vmatprep.subr.mxu0 0.0
        %2032 = vmatpush1.msra.mxu0 0.0
        %2033 = vmatprep.subr.mxu0 0.0
        %2034 = vmatpush1.msra.mxu0 0.0
        %2035 = vmatprep.subr.mxu0 0.0
        %2036 = vmatpush1.msra.mxu0 0.0
        %2037 = vmatprep.mubr.f32.mxu0 0.0
        %2038 = vmatmul.mubr.f32.gmra.mrb[0].mxu0 %v1953
        %v2039 = vpop.f32.mrb[0].mxu0
        %v2040 = vadd.f32 0.0, %v2039
        %v2041 = vpop.f32.mrb[0].mxu0
        %2042 = vmatprep.mubr.f32.mxu0 0.0
        %2043 = vmatmul.mubr.f32.gmra.mrb[0].mxu0 %v1954
        %v2044 = vpop.f32.mrb[0].mxu0
        %v2045 = vadd.f32 0.0, %v2044
        %v2046 = vpop.f32.mrb[0].mxu0
        %2047 = vmatprep.mubr.f32.mxu0 0.0
        %2048 = vmatmul.mubr.f32.gmra.mrb[0].mxu0 %v1955
        %v2049 = vpop.f32.mrb[0].mxu0
        %v2050 = vadd.f32 0.0, %v2049
        %v2051 = vpop.f32.mrb[0].mxu0
        %2052 = vmatprep.mubr.f32.mxu0 0.0
        %2053 = vmatmul.mubr.f32.gmra.mrb[0].mxu0 %v1956
        %v2054 = vpop.f32.mrb[0].mxu0
        %v2055 = vadd.f32 0.0, %v2054
        %v2056 = vpop.f32.mrb[0].mxu0
        %2057 = vdwg.mxu0
        %vm2058 = vcmask 7168
        %2059 = vst.msk [vmem:[%s433] sm:$0xff] %vm2058, %v2040
        %2060 = vst.msk [vmem:[%s433 + $0x8] sm:$0xff] %vm2058, %v2045
        %2061 = vst.msk [vmem:[%s433 + $0x10] sm:$0xff] %vm2058, %v2050
        %2062 = vst.msk [vmem:[%s433 + $0x18] sm:$0xff] %vm2058, %v2055
        %s2063 = sand.u32 %s236, 1
        %s2064 = scalar_lea.sflag [#allocation6], %s2063
        %s2065 = sand.u32 %s236, 1
        %s2066 = smul.addr %s2065, 32
        %s2067 = scalar_lea.vmem [#allocation5], %s2066
        %s2068 = smul.u32 4, %s29
        %p2069 = scmp.lt.s32.totalorder %s28, 2
        %s2070 = scalar_select %p2069, %s28, 2
        %p2071 = scmp.lt.s32.totalorder %s2068, 7
        %s2072 = scalar_select %p2071, %s2068, 7
        %s2073 = smul.addr %s2070, 8
        %s2074 = sadd.s32 %s2072, %s2073
        %s2075 = smul.addr %s2074, 8
        %s2076 = scalar_lea.vmem %s9, %s2075
        // Predicated region
        $region57: #{tpu_custom_call.1} parent=51 // pred_check
          %p2077 = pneg %p246
        $region58: #{tpu_custom_call.1} parent=51 // pred_check_branch
          %2079 = sbr.rel (%p2077) target = $region60
        $region59: #{tpu_custom_call.1} parent=51 // pred_region
          %s2080 = smul.u32 4, %s29
          %s2082 = ssub.s32 512, 512
          %2083 = vsyncadd %s2064, %s2082
          %s2084 = smul.addr %s28, 8
          %s2085 = sadd.s32 %s2080, %s2084
          %s2086 = smul.addr %s2085, 128
          %s2087 = scalar_lea.hbm %s8, %s2086
          %s2088 = sshll.u32 %s2067, 4
          %s2089 = int_to_ptr.vmem [resolvable:$true] %s2088
          %2094 = dma.vmem_to_hbm [thread:$0]  %s2089, 512, %s2087, %s2064, 128, 128, 8
        $region60: #{tpu_custom_call.1} parent=51 // pred_fallthru
          _
        // Predicated region
        $region61: #{tpu_custom_call.1} parent=51 // pred_check
          %p2095 = pneg %p274
        $region62: #{tpu_custom_call.1} parent=51 // pred_check_branch
          %2097 = sbr.rel (%p2095) target = $region64
        $region63: #{tpu_custom_call.1} parent=51 // pred_region
          %s2098 = smul.u32 4, %s29
        $region64: #{tpu_custom_call.1} parent=51 // pred_fallthru
          _
      $region52: #{tpu_custom_call.1} parent=5 // pred_fallthru
        _
      %p2099 = scmp.le.s32.totalorder 2, %s19
      // Predicated region
      $region65: #{tpu_custom_call.1} parent=5 // pred_check
        %p2100 = pneg %p2099
      $region66: #{tpu_custom_call.1} parent=5 // pred_check_branch
        %2102 = sbr.rel (%p2100) target = $region68
      $region67: #{tpu_custom_call.1} parent=5 // pred_region
        %s2103 = ssub.s32 %s19, 2
        // Predicated region
        $region69: #{tpu_custom_call.1} parent=67 // pred_check
          %p2104 = pneg %p252
        $region70: #{tpu_custom_call.1} parent=67 // pred_check_branch
          %2106 = sbr.rel (%p2104) target = $region72
        $region71: #{tpu_custom_call.1} parent=67 // pred_region
          %s2107 = sand.u32 %s237, 1
          %s2108 = scalar_lea.sflag [#allocation6], %s2107
          %s2109 = sand.u32 %s237, 1
          %s2110 = smul.addr %s2109, 32
          %s2111 = scalar_lea.vmem [#allocation5], %s2110
          %2112 = dma.done %s2108, 512
        $region72: #{tpu_custom_call.1} parent=67 // pred_fallthru
          _
        // Predicated region
        $region73: #{tpu_custom_call.1} parent=67 // pred_check
          %p2113 = pneg %p280
        $region74: #{tpu_custom_call.1} parent=67 // pred_check_branch
          %2115 = sbr.rel (%p2113) target = $region76
        $region75: #{tpu_custom_call.1} parent=67 // pred_region
          %s2116 = smul.u32 4, %s31
          %p2117 = scmp.lt.s32.totalorder %s30, 2
          %s2118 = scalar_select %p2117, %s30, 2
          %p2119 = scmp.lt.s32.totalorder %s2116, 7
          %s2120 = scalar_select %p2119, %s2116, 7
          %s2121 = smul.addr %s2118, 8
          %s2122 = sadd.s32 %s2120, %s2121
          %s2123 = smul.addr %s2122, 8
          %s2124 = scalar_lea.vmem %s9, %s2123
        $region76: #{tpu_custom_call.1} parent=67 // pred_fallthru
          _
      $region68: #{tpu_custom_call.1} parent=5 // pred_fallthru
        _
    $region6: #{tpu_custom_call.1} parent=1 // loop_footer
      %s23 = sadd.s32 1, %s19
    $region7: #{tpu_custom_call.1} parent=1 // loop_footer_branch
      %18 = sbr.rel target = $region3
    $region8: #{tpu_custom_call.1} parent=1 // loop_exit
      _
    %2125 = vsyncpa [#allocation6], 1
    %s2126 = scalar_lea.sflag [#allocation6], 1
    %2127 = vsyncpa %s2126, 1

</llo_original>
